<compile_context>
chip_gen: v5e
topology: v5e:2x2
jax: 0.10.0
libtpu: 0.0.40
codegen_flags: <defaults>
</compile_context>

<pallas_src>
import jax
import jax.numpy as jnp
from jax.experimental import pallas as pl
from jax.experimental.pallas import tpu as pltpu


def _policy_kernel(x_ref, atr_ref, adj_ref, apa_ref,
                   ohs_ref, ohd_ref, gsel_ref, gbatch_ref,
                   w1r_ref, w1n_ref, b1_ref,
                   w2r_ref, w2n_ref, b2_ref,
                   w3r_ref, w3n_ref, b3_ref,
                   wl2_ref, bl2_ref,
                   wts_ref, bts_ref, wtd_ref, btd_ref,
                   out_ref):
    f32 = jnp.float32
    cdt = w1r_ref.dtype      # MXU operand dtype (f32 or bf16); acc stays f32

    def gconv(h, a, wr_ref, wn_ref, b_ref):
        # One block-diagonal aggregation matmul for the whole BT-graph block,
        # plus two separate projections (no lane concat of [h | agg]).
        hc = h.astype(cdt)
        agg = jnp.dot(a, hc, preferred_element_type=f32).astype(cdt)
        out = (jnp.dot(hc, wr_ref[...], preferred_element_type=f32)
               + jnp.dot(agg, wn_ref[...], preferred_element_type=f32))
        return out + b_ref[...].astype(f32)

    x = x_ref[...]                                                  # [BT*N, F]
    h = jnp.maximum(gconv(x, atr_ref[...], w1r_ref, w1n_ref, b1_ref), 0.0)
    h = jnp.maximum(gconv(h, adj_ref[...], w2r_ref, w2n_ref, b2_ref), 0.0)
    h = jnp.maximum(gconv(h, apa_ref[...], w3r_ref, w3n_ref, b3_ref), 0.0)

    hc = h.astype(cdt)
    h = jnp.maximum(jnp.dot(hc, wl2_ref[...], preferred_element_type=f32)
                    + bl2_ref[...].astype(f32), 0.0)                # lin2+relu

    # Folded lins0 -> lins1 -> lin1, pre-split into start/dest halves so we
    # never take a sub-128-lane slice of h.
    hc = h.astype(cdt)
    hs = (jnp.dot(hc, wts_ref[...], preferred_element_type=f32)
          + bts_ref[...].astype(f32)).astype(cdt)                   # [BT*N, n]
    hd = (jnp.dot(hc, wtd_ref[...], preferred_element_type=f32)
          + btd_ref[...].astype(f32)).astype(cdt)                   # [BT*N, n]

    # Block-diagonal one-hot gathers over all BT sub-batches at once (MXU).
    starts = jnp.dot(ohs_ref[...], hs, preferred_element_type=f32)  # [BT*IJ,n]
    dests = jnp.dot(ohd_ref[...], hd, preferred_element_type=f32)   # [BT*IJ,n]

    # einsum 'bijk,bijk->bi': per-pair dot over k, scatter to action columns,
    # then sum over the J pairs / select the sub-batch row via one matmul.
    q = jnp.sum(starts * dests, axis=1, keepdims=True)              # [BT*IJ,1]
    qsel = q * gsel_ref[...]                                        # [BT*IJ,I]
    scores = jnp.dot(gbatch_ref[...], qsel,
                     preferred_element_type=f32)                    # [BT, I]

    # Softmax over the action (lane) axis — exact divide so rows sum to 1.
    m = jnp.max(scores, axis=1, keepdims=True)
    e = jnp.exp(scores - m)
    denom = jnp.sum(e, axis=1, keepdims=True)
    out_ref[...] = (e / denom).astype(out_ref.dtype)                # [BT, I]


def policy_net_forward(params, actions, x, adj, pass_adj, train_adj, *,
                       block_graphs=None, compute_dtype=jnp.float32,
                       vmem_limit_bytes=None):
    B, N, F = x.shape
    I, J, _ = actions.shape
    IJ = I * J
    av = params["lin1_w"].shape[1]
    n_half = av // 2

    # Block size over graphs.  Default: whole batch in one grid step (best on
    # single-TC v5e/v6e: amortizes per-step overhead, fills the MXU M-dim).
    # On v7x (2 TCs, 64 MiB VMEM) pass block_graphs=ceil(B/2) so the 'parallel'
    # grid axis splits evenly across both TensorCores, and set
    # vmem_limit_bytes explicitly with headroom.
    BT = B if block_graphs is None else max(1, min(block_graphs, B))
    num_blocks = -(-B // BT)
    B_pad = num_blocks * BT
    cdt = compute_dtype

    def pad_b(a):
        if B_pad == B:
            return a
        return jnp.pad(a, ((0, B_pad - B),) + ((0, 0),) * (a.ndim - 1))

    # Node features as (num_blocks, BT*N, F): last two block dims == full dims,
    # so no (8,128) alignment constraint on BT.
    x_blk = pad_b(x).reshape(num_blocks, BT * N, F).astype(cdt)

    # Block-diagonal adjacency per grid block: one (BT*N, BT*N) matmul replaces
    # BT tiny per-graph matmuls + an in-kernel sublane concat.
    def block_diag(a):
        ab = pad_b(a).reshape(num_blocks, BT, N, N).astype(cdt)
        eye = jnp.eye(BT, dtype=cdt)
        bd = jnp.einsum("kbij,bc->kbicj", ab, eye)
        return bd.reshape(num_blocks, BT * N, BT * N)

    train_bd = block_diag(train_adj)
    adj_bd = block_diag(adj)
    pass_bd = block_diag(pass_adj)

    # ---- static gather / grouping masks (constant across the batch) ----
    acts = jnp.asarray(actions, jnp.int32)
    act_s = acts[..., 0].reshape(IJ)
    act_d = acts[..., 1].reshape(IJ)
    r = jnp.arange(BT * IJ, dtype=jnp.int32)
    b_idx = r // IJ
    p_idx = r % IJ
    oh_s = jax.nn.one_hot(b_idx * N + act_s[p_idx], BT * N, dtype=cdt)
    oh_d = jax.nn.one_hot(b_idx * N + act_d[p_idx], BT * N, dtype=cdt)
    g_sel = jax.nn.one_hot(p_idx // J, I, dtype=jnp.float32)        # [BT*IJ,I]
    g_batch = (b_idx[None, :] == jnp.arange(BT, dtype=jnp.int32)[:, None]
               ).astype(jnp.float32)                                # [BT,BT*IJ]

    # ---- folded / split weights ----
    p = params
    w_tail = (p["lins0_w"] @ p["lins1_w"] @ p["lin1_w"]).astype(jnp.float32)
    b_tail = ((p["lins0_b"] @ p["lins1_w"] + p["lins1_b"]) @ p["lin1_w"]
              + p["lin1_b"]).astype(jnp.float32)

    def c(a):
        return jnp.asarray(a, cdt)

    const_inputs = [
        oh_s, oh_d, g_sel, g_batch,
        c(p["conv1_wr"]), c(p["conv1_wn"]), c(p["conv1_b"]),
        c(p["conv2_wr"]), c(p["conv2_wn"]), c(p["conv2_b"]),
        c(p["conv3_wr"]), c(p["conv3_wn"]), c(p["conv3_b"]),
        c(p["lin2_w"]), c(p["lin2_b"]),
        c(w_tail[:, :n_half]), c(b_tail[:, :n_half]),
        c(w_tail[:, n_half:]), c(b_tail[:, n_half:]),
    ]

    def const_spec(a):
        # TODO(synk): when VMEM is tight (v7x, large BT), request
        # pipeline_mode=pl.Buffered(1) here so resident constants are not
        # double-buffered.
        return pl.BlockSpec(a.shape, lambda b: (0, 0))

    def blk3_spec():
        return pl.BlockSpec((None, BT * N, BT * N), lambda b: (b, 0, 0))

    in_specs = ([pl.BlockSpec((None, BT * N, F), lambda b: (b, 0, 0)),
                 blk3_spec(), blk3_spec(), blk3_spec()]
                + [const_spec(a) for a in const_inputs])
    out_spec = pl.BlockSpec((None, BT, I), lambda b: (b, 0, 0))

    probs = pl.pallas_call(
        _policy_kernel,
        grid=(num_blocks,),
        in_specs=in_specs,
        out_specs=out_spec,
        out_shape=jax.ShapeDtypeStruct((num_blocks, BT, I), jnp.float32),
        compiler_params=pltpu.CompilerParams(
            dimension_semantics=("parallel",),
            vmem_limit_bytes=vmem_limit_bytes),
    )(x_blk, train_bd, adj_bd, pass_bd, *const_inputs)

    return probs.reshape(B_pad, I)[:B]


def reference_forward(params, actions, x, adj, pass_adj, train_adj):
    p = params

    def gconv(h, a, wr, wn, b):
        agg = jnp.einsum("bij,bjf->bif", a, h)
        return (jnp.einsum("bnf,fg->bng", h, wr)
                + jnp.einsum("bnf,fg->bng", agg, wn) + b)

    h = jax.nn.relu(gconv(x, train_adj, p["conv1_wr"], p["conv1_wn"], p["conv1_b"]))
    h = jax.nn.relu(gconv(h, adj, p["conv2_wr"], p["conv2_wn"], p["conv2_b"]))
    h = jax.nn.relu(gconv(h, pass_adj, p["conv3_wr"], p["conv3_wn"], p["conv3_b"]))
    h = jax.nn.relu(jnp.einsum("bnf,fg->bng", h, p["lin2_w"]) + p["lin2_b"])
    h = jnp.einsum("bnf,fg->bng", h, p["lins0_w"]) + p["lins0_b"]
    h = jnp.einsum("bnf,fg->bng", h, p["lins1_w"]) + p["lins1_b"]
    h = jnp.einsum("bnf,fg->bng", h, p["lin1_w"]) + p["lin1_b"]

    n = p["lin1_w"].shape[1] // 2
    start_vecs = h[:, :, :n]
    dest_vecs = h[:, :, n:]
    starts = start_vecs[:, actions[..., 0]]   # [B, I, J, n]
    dests = dest_vecs[:, actions[..., 1]]     # [B, I, J, n]
    scores = jnp.einsum("bijk,bijk->bi", starts, dests)
    return jax.nn.softmax(scores, axis=1)


def init_params(key, f_in, hidden, action_vector_size):
    names_shapes = [
        ("conv1_wr", (f_in, hidden)), ("conv1_wn", (f_in, hidden)), ("conv1_b", (1, hidden)),
        ("conv2_wr", (hidden, hidden)), ("conv2_wn", (hidden, hidden)), ("conv2_b", (1, hidden)),
        ("conv3_wr", (hidden, hidden)), ("conv3_wn", (hidden, hidden)), ("conv3_b", (1, hidden)),
        ("lin2_w", (hidden, hidden)), ("lin2_b", (1, hidden)),
        ("lins0_w", (hidden, hidden)), ("lins0_b", (1, hidden)),
        ("lins1_w", (hidden, hidden)), ("lins1_b", (1, hidden)),
        ("lin1_w", (hidden, action_vector_size)), ("lin1_b", (1, action_vector_size)),
    ]
    params = {}
    keys = jax.random.split(key, len(names_shapes))
    for k, (name, shape) in zip(keys, names_shapes):
        fan_in = shape[0] if shape[0] > 1 else shape[1]
        scale = 1.0 / (fan_in ** 0.5)
        params[name] = (scale * jax.random.normal(k, shape)).astype(jnp.float32)
    return params


if __name__ == "__main__":
    # Small, module-consistent shapes.
    B, N = 10, 16                # batch of graphs, nodes per graph
    F_IN = 4                     # config.n_node_features
    HIDDEN = 32                  # config.hidden_neurons
    AV = 8                       # config.action_vector_size (n = 4)
    I, J = 6, 2                  # actions: [I, J, 2] node-index pairs

    root = jax.random.PRNGKey(0)
    kp, kx, ka1, ka2, ka3, kw1, kw2, kw3, kact = jax.random.split(root, 9)

    params = init_params(kp, F_IN, HIDDEN, AV)
    x = jax.random.normal(kx, (B, N, F_IN), dtype=jnp.float32)

    def rand_adj(kmask, kw):
        mask = (jax.random.uniform(kmask, (B, N, N)) < 0.3).astype(jnp.float32)
        w = jax.random.uniform(kw, (B, N, N), dtype=jnp.float32)
        return mask * w

    adj = rand_adj(ka1, kw1)
    pass_adj = rand_adj(ka2, kw2)
    train_adj = rand_adj(ka3, kw3)
    actions = jax.random.randint(kact, (I, J, 2), 0, N, dtype=jnp.int32)

    ref = jax.block_until_ready(
        reference_forward(params, actions, x, adj, pass_adj, train_adj))

    # 1) Whole batch in one grid step (v5e/v6e default), f32 compute.
    probs = jax.block_until_ready(
        policy_net_forward(params, actions, x, adj, pass_adj, train_adj))
    assert probs.shape == (B, I), probs.shape
    assert bool(jnp.all(jnp.isfinite(probs)))
    assert bool(jnp.allclose(jnp.sum(probs, axis=1), 1.0, atol=1e-3))
    assert bool(jnp.allclose(probs, ref, rtol=2e-2, atol=2e-3)), (probs, ref)

    # 2) Blocked over graphs (multi-step grid + padding path, v7x-style split).
    probs_blk = jax.block_until_ready(
        policy_net_forward(params, actions, x, adj, pass_adj, train_adj,
                           block_graphs=4))
    assert probs_blk.shape == (B, I)
    assert bool(jnp.allclose(jnp.sum(probs_blk, axis=1), 1.0, atol=1e-3))
    assert bool(jnp.allclose(probs_blk, ref, rtol=2e-2, atol=2e-3))

    # 3) bf16 MXU operands (v6e/v7x option), f32 accumulation: loose check.
    probs_bf16 = jax.block_until_ready(
        policy_net_forward(params, actions, x, adj, pass_adj, train_adj,
                           compute_dtype=jnp.bfloat16))
    assert probs_bf16.shape == (B, I)
    assert bool(jnp.all(jnp.isfinite(probs_bf16)))
    assert bool(jnp.allclose(jnp.sum(probs_bf16, axis=1), 1.0, atol=1e-3))
    assert bool(jnp.allclose(probs_bf16, ref, atol=0.1))

    print("KERNEL_OK")
</pallas_src>

<mosaic_0001>
module attributes {stable_mosaic.version = 11 : i64} {
  func.func @_policy_kernel(%arg0: i32, %arg1: memref<1x160x4xf32, #tpu.memory_space<vmem>>, %arg2: memref<1x160x160xf32, #tpu.memory_space<vmem>>, %arg3: memref<1x160x160xf32, #tpu.memory_space<vmem>>, %arg4: memref<1x160x160xf32, #tpu.memory_space<vmem>>, %arg5: memref<120x160xf32, #tpu.memory_space<vmem>>, %arg6: memref<120x160xf32, #tpu.memory_space<vmem>>, %arg7: memref<120x6xf32, #tpu.memory_space<vmem>>, %arg8: memref<10x120xf32, #tpu.memory_space<vmem>>, %arg9: memref<4x32xf32, #tpu.memory_space<vmem>>, %arg10: memref<4x32xf32, #tpu.memory_space<vmem>>, %arg11: memref<1x32xf32, #tpu.memory_space<vmem>>, %arg12: memref<32x32xf32, #tpu.memory_space<vmem>>, %arg13: memref<32x32xf32, #tpu.memory_space<vmem>>, %arg14: memref<1x32xf32, #tpu.memory_space<vmem>>, %arg15: memref<32x32xf32, #tpu.memory_space<vmem>>, %arg16: memref<32x32xf32, #tpu.memory_space<vmem>>, %arg17: memref<1x32xf32, #tpu.memory_space<vmem>>, %arg18: memref<32x32xf32, #tpu.memory_space<vmem>>, %arg19: memref<1x32xf32, #tpu.memory_space<vmem>>, %arg20: memref<32x4xf32, #tpu.memory_space<vmem>>, %arg21: memref<1x4xf32, #tpu.memory_space<vmem>>, %arg22: memref<32x4xf32, #tpu.memory_space<vmem>>, %arg23: memref<1x4xf32, #tpu.memory_space<vmem>>, %arg24: memref<1x10x6xf32, #tpu.memory_space<vmem>>) attributes {dimension_semantics = [#tpu.dimension_semantics<parallel>], iteration_bounds = array<i64: 1>, scalar_prefetch = 0 : i64, scratch_operands = 0 : i64, tpu.core_type = #tpu.core_type<tc>, window_params = [{transform_indices = @transform_0, window_bounds = array<i64: 1, 160, 4>}, {transform_indices = @transform_1, window_bounds = array<i64: 1, 160, 160>}, {transform_indices = @transform_2, window_bounds = array<i64: 1, 160, 160>}, {transform_indices = @transform_3, window_bounds = array<i64: 1, 160, 160>}, {pipeline_mode = #tpu.pipeline_mode<synchronous>, transform_indices = @transform_4, window_bounds = array<i64: 120, 160>}, {pipeline_mode = #tpu.pipeline_mode<synchronous>, transform_indices = @transform_5, window_bounds = array<i64: 120, 160>}, {pipeline_mode = #tpu.pipeline_mode<synchronous>, transform_indices = @transform_6, window_bounds = array<i64: 120, 6>}, {pipeline_mode = #tpu.pipeline_mode<synchronous>, transform_indices = @transform_7, window_bounds = array<i64: 10, 120>}, {pipeline_mode = #tpu.pipeline_mode<synchronous>, transform_indices = @transform_8, window_bounds = array<i64: 4, 32>}, {pipeline_mode = #tpu.pipeline_mode<synchronous>, transform_indices = @transform_9, window_bounds = array<i64: 4, 32>}, {pipeline_mode = #tpu.pipeline_mode<synchronous>, transform_indices = @transform_10, window_bounds = array<i64: 1, 32>}, {pipeline_mode = #tpu.pipeline_mode<synchronous>, transform_indices = @transform_11, window_bounds = array<i64: 32, 32>}, {pipeline_mode = #tpu.pipeline_mode<synchronous>, transform_indices = @transform_12, window_bounds = array<i64: 32, 32>}, {pipeline_mode = #tpu.pipeline_mode<synchronous>, transform_indices = @transform_13, window_bounds = array<i64: 1, 32>}, {pipeline_mode = #tpu.pipeline_mode<synchronous>, transform_indices = @transform_14, window_bounds = array<i64: 32, 32>}, {pipeline_mode = #tpu.pipeline_mode<synchronous>, transform_indices = @transform_15, window_bounds = array<i64: 32, 32>}, {pipeline_mode = #tpu.pipeline_mode<synchronous>, transform_indices = @transform_16, window_bounds = array<i64: 1, 32>}, {pipeline_mode = #tpu.pipeline_mode<synchronous>, transform_indices = @transform_17, window_bounds = array<i64: 32, 32>}, {pipeline_mode = #tpu.pipeline_mode<synchronous>, transform_indices = @transform_18, window_bounds = array<i64: 1, 32>}, {pipeline_mode = #tpu.pipeline_mode<synchronous>, transform_indices = @transform_19, window_bounds = array<i64: 32, 4>}, {pipeline_mode = #tpu.pipeline_mode<synchronous>, transform_indices = @transform_20, window_bounds = array<i64: 1, 4>}, {pipeline_mode = #tpu.pipeline_mode<synchronous>, transform_indices = @transform_21, window_bounds = array<i64: 32, 4>}, {pipeline_mode = #tpu.pipeline_mode<synchronous>, transform_indices = @transform_22, window_bounds = array<i64: 1, 4>}, {transform_indices = @transform_23, window_bounds = array<i64: 1, 10, 6>}]} {
    %c0 = arith.constant 0 : index
    %c0_0 = arith.constant 0 : index
    %c0_1 = arith.constant 0 : index
    %0 = vector.load %arg1[%c0, %c0_0, %c0_1] : memref<1x160x4xf32, #tpu.memory_space<vmem>>, vector<1x160x4xf32>
    %1 = vector.shape_cast %0 : vector<1x160x4xf32> to vector<160x4xf32>
    %c0_2 = arith.constant 0 : index
    %c0_3 = arith.constant 0 : index
    %c0_4 = arith.constant 0 : index
    %2 = vector.load %arg2[%c0_2, %c0_3, %c0_4] : memref<1x160x160xf32, #tpu.memory_space<vmem>>, vector<1x160x160xf32>
    %3 = vector.shape_cast %2 : vector<1x160x160xf32> to vector<160x160xf32>
    %cst = arith.constant dense<0.000000e+00> : vector<160x4xf32>
    %4 = tpu.matmul %3, %1, %cst {dimension_numbers = #tpu.dot_dimension_numbers<[1], [0], [0], [1], [0, 0, 1, 1], [], []>} : vector<160x160xf32>, vector<160x4xf32>, vector<160x4xf32> -> vector<160x4xf32>
    %c0_5 = arith.constant 0 : index
    %c0_6 = arith.constant 0 : index
    %5 = vector.load %arg9[%c0_5, %c0_6] : memref<4x32xf32, #tpu.memory_space<vmem>>, vector<4x32xf32>
    %cst_7 = arith.constant dense<0.000000e+00> : vector<160x32xf32>
    %6 = tpu.matmul %1, %5, %cst_7 {dimension_numbers = #tpu.dot_dimension_numbers<[1], [0], [0], [1], [0, 0, 1, 1], [], []>} : vector<160x4xf32>, vector<4x32xf32>, vector<160x32xf32> -> vector<160x32xf32>
    %c0_8 = arith.constant 0 : index
    %c0_9 = arith.constant 0 : index
    %7 = vector.load %arg10[%c0_8, %c0_9] : memref<4x32xf32, #tpu.memory_space<vmem>>, vector<4x32xf32>
    %cst_10 = arith.constant dense<0.000000e+00> : vector<160x32xf32>
    %8 = tpu.matmul %4, %7, %cst_10 {dimension_numbers = #tpu.dot_dimension_numbers<[1], [0], [0], [1], [0, 0, 1, 1], [], []>} : vector<160x4xf32>, vector<4x32xf32>, vector<160x32xf32> -> vector<160x32xf32>
    %9 = arith.addf %6, %8 : vector<160x32xf32>
    %c0_11 = arith.constant 0 : index
    %c0_12 = arith.constant 0 : index
    %10 = vector.load %arg11[%c0_11, %c0_12] : memref<1x32xf32, #tpu.memory_space<vmem>>, vector<1x32xf32>
    %11 = vector.broadcast %10 : vector<1x32xf32> to vector<160x32xf32>
    %12 = arith.addf %9, %11 : vector<160x32xf32>
    %cst_13 = arith.constant 0.000000e+00 : f32
    %13 = vector.broadcast %cst_13 : f32 to vector<160x32xf32>
    %14 = arith.maximumf %12, %13 : vector<160x32xf32>
    %c0_14 = arith.constant 0 : index
    %c0_15 = arith.constant 0 : index
    %c0_16 = arith.constant 0 : index
    %15 = vector.load %arg3[%c0_14, %c0_15, %c0_16] : memref<1x160x160xf32, #tpu.memory_space<vmem>>, vector<1x160x160xf32>
    %16 = vector.shape_cast %15 : vector<1x160x160xf32> to vector<160x160xf32>
    %cst_17 = arith.constant dense<0.000000e+00> : vector<160x32xf32>
    %17 = tpu.matmul %16, %14, %cst_17 {dimension_numbers = #tpu.dot_dimension_numbers<[1], [0], [0], [1], [0, 0, 1, 1], [], []>} : vector<160x160xf32>, vector<160x32xf32>, vector<160x32xf32> -> vector<160x32xf32>
    %c0_18 = arith.constant 0 : index
    %c0_19 = arith.constant 0 : index
    %18 = vector.load %arg12[%c0_18, %c0_19] : memref<32x32xf32, #tpu.memory_space<vmem>>, vector<32x32xf32>
    %cst_20 = arith.constant dense<0.000000e+00> : vector<160x32xf32>
    %19 = tpu.matmul %14, %18, %cst_20 {dimension_numbers = #tpu.dot_dimension_numbers<[1], [0], [0], [1], [0, 0, 1, 1], [], []>} : vector<160x32xf32>, vector<32x32xf32>, vector<160x32xf32> -> vector<160x32xf32>
    %c0_21 = arith.constant 0 : index
    %c0_22 = arith.constant 0 : index
    %20 = vector.load %arg13[%c0_21, %c0_22] : memref<32x32xf32, #tpu.memory_space<vmem>>, vector<32x32xf32>
    %cst_23 = arith.constant dense<0.000000e+00> : vector<160x32xf32>
    %21 = tpu.matmul %17, %20, %cst_23 {dimension_numbers = #tpu.dot_dimension_numbers<[1], [0], [0], [1], [0, 0, 1, 1], [], []>} : vector<160x32xf32>, vector<32x32xf32>, vector<160x32xf32> -> vector<160x32xf32>
    %22 = arith.addf %19, %21 : vector<160x32xf32>
    %c0_24 = arith.constant 0 : index
    %c0_25 = arith.constant 0 : index
    %23 = vector.load %arg14[%c0_24, %c0_25] : memref<1x32xf32, #tpu.memory_space<vmem>>, vector<1x32xf32>
    %24 = vector.broadcast %23 : vector<1x32xf32> to vector<160x32xf32>
    %25 = arith.addf %22, %24 : vector<160x32xf32>
    %cst_26 = arith.constant 0.000000e+00 : f32
    %26 = vector.broadcast %cst_26 : f32 to vector<160x32xf32>
    %27 = arith.maximumf %25, %26 : vector<160x32xf32>
    %c0_27 = arith.constant 0 : index
    %c0_28 = arith.constant 0 : index
    %c0_29 = arith.constant 0 : index
    %28 = vector.load %arg4[%c0_27, %c0_28, %c0_29] : memref<1x160x160xf32, #tpu.memory_space<vmem>>, vector<1x160x160xf32>
    %29 = vector.shape_cast %28 : vector<1x160x160xf32> to vector<160x160xf32>
    %cst_30 = arith.constant dense<0.000000e+00> : vector<160x32xf32>
    %30 = tpu.matmul %29, %27, %cst_30 {dimension_numbers = #tpu.dot_dimension_numbers<[1], [0], [0], [1], [0, 0, 1, 1], [], []>} : vector<160x160xf32>, vector<160x32xf32>, vector<160x32xf32> -> vector<160x32xf32>
    %c0_31 = arith.constant 0 : index
    %c0_32 = arith.constant 0 : index
    %31 = vector.load %arg15[%c0_31, %c0_32] : memref<32x32xf32, #tpu.memory_space<vmem>>, vector<32x32xf32>
    %cst_33 = arith.constant dense<0.000000e+00> : vector<160x32xf32>
    %32 = tpu.matmul %27, %31, %cst_33 {dimension_numbers = #tpu.dot_dimension_numbers<[1], [0], [0], [1], [0, 0, 1, 1], [], []>} : vector<160x32xf32>, vector<32x32xf32>, vector<160x32xf32> -> vector<160x32xf32>
    %c0_34 = arith.constant 0 : index
    %c0_35 = arith.constant 0 : index
    %33 = vector.load %arg16[%c0_34, %c0_35] : memref<32x32xf32, #tpu.memory_space<vmem>>, vector<32x32xf32>
    %cst_36 = arith.constant dense<0.000000e+00> : vector<160x32xf32>
    %34 = tpu.matmul %30, %33, %cst_36 {dimension_numbers = #tpu.dot_dimension_numbers<[1], [0], [0], [1], [0, 0, 1, 1], [], []>} : vector<160x32xf32>, vector<32x32xf32>, vector<160x32xf32> -> vector<160x32xf32>
    %35 = arith.addf %32, %34 : vector<160x32xf32>
    %c0_37 = arith.constant 0 : index
    %c0_38 = arith.constant 0 : index
    %36 = vector.load %arg17[%c0_37, %c0_38] : memref<1x32xf32, #tpu.memory_space<vmem>>, vector<1x32xf32>
    %37 = vector.broadcast %36 : vector<1x32xf32> to vector<160x32xf32>
    %38 = arith.addf %35, %37 : vector<160x32xf32>
    %cst_39 = arith.constant 0.000000e+00 : f32
    %39 = vector.broadcast %cst_39 : f32 to vector<160x32xf32>
    %40 = arith.maximumf %38, %39 : vector<160x32xf32>
    %c0_40 = arith.constant 0 : index
    %c0_41 = arith.constant 0 : index
    %41 = vector.load %arg18[%c0_40, %c0_41] : memref<32x32xf32, #tpu.memory_space<vmem>>, vector<32x32xf32>
    %cst_42 = arith.constant dense<0.000000e+00> : vector<160x32xf32>
    %42 = tpu.matmul %40, %41, %cst_42 {dimension_numbers = #tpu.dot_dimension_numbers<[1], [0], [0], [1], [0, 0, 1, 1], [], []>} : vector<160x32xf32>, vector<32x32xf32>, vector<160x32xf32> -> vector<160x32xf32>
    %c0_43 = arith.constant 0 : index
    %c0_44 = arith.constant 0 : index
    %43 = vector.load %arg19[%c0_43, %c0_44] : memref<1x32xf32, #tpu.memory_space<vmem>>, vector<1x32xf32>
    %44 = vector.broadcast %43 : vector<1x32xf32> to vector<160x32xf32>
    %45 = arith.addf %42, %44 : vector<160x32xf32>
    %cst_45 = arith.constant 0.000000e+00 : f32
    %46 = vector.broadcast %cst_45 : f32 to vector<160x32xf32>
    %47 = arith.maximumf %45, %46 : vector<160x32xf32>
    %c0_46 = arith.constant 0 : index
    %c0_47 = arith.constant 0 : index
    %48 = vector.load %arg20[%c0_46, %c0_47] : memref<32x4xf32, #tpu.memory_space<vmem>>, vector<32x4xf32>
    %cst_48 = arith.constant dense<0.000000e+00> : vector<160x4xf32>
    %49 = tpu.matmul %47, %48, %cst_48 {dimension_numbers = #tpu.dot_dimension_numbers<[1], [0], [0], [1], [0, 0, 1, 1], [], []>} : vector<160x32xf32>, vector<32x4xf32>, vector<160x4xf32> -> vector<160x4xf32>
    %c0_49 = arith.constant 0 : index
    %c0_50 = arith.constant 0 : index
    %50 = vector.load %arg21[%c0_49, %c0_50] : memref<1x4xf32, #tpu.memory_space<vmem>>, vector<1x4xf32>
    %51 = vector.broadcast %50 : vector<1x4xf32> to vector<160x4xf32>
    %52 = arith.addf %49, %51 : vector<160x4xf32>
    %c0_51 = arith.constant 0 : index
    %c0_52 = arith.constant 0 : index
    %53 = vector.load %arg22[%c0_51, %c0_52] : memref<32x4xf32, #tpu.memory_space<vmem>>, vector<32x4xf32>
    %cst_53 = arith.constant dense<0.000000e+00> : vector<160x4xf32>
    %54 = tpu.matmul %47, %53, %cst_53 {dimension_numbers = #tpu.dot_dimension_numbers<[1], [0], [0], [1], [0, 0, 1, 1], [], []>} : vector<160x32xf32>, vector<32x4xf32>, vector<160x4xf32> -> vector<160x4xf32>
    %c0_54 = arith.constant 0 : index
    %c0_55 = arith.constant 0 : index
    %55 = vector.load %arg23[%c0_54, %c0_55] : memref<1x4xf32, #tpu.memory_space<vmem>>, vector<1x4xf32>
    %56 = vector.broadcast %55 : vector<1x4xf32> to vector<160x4xf32>
    %57 = arith.addf %54, %56 : vector<160x4xf32>
    %c0_56 = arith.constant 0 : index
    %c0_57 = arith.constant 0 : index
    %58 = vector.load %arg5[%c0_56, %c0_57] : memref<120x160xf32, #tpu.memory_space<vmem>>, vector<120x160xf32>
    %cst_58 = arith.constant dense<0.000000e+00> : vector<120x4xf32>
    %59 = tpu.matmul %58, %52, %cst_58 {dimension_numbers = #tpu.dot_dimension_numbers<[1], [0], [0], [1], [0, 0, 1, 1], [], []>} : vector<120x160xf32>, vector<160x4xf32>, vector<120x4xf32> -> vector<120x4xf32>
    %c0_59 = arith.constant 0 : index
    %c0_60 = arith.constant 0 : index
    %60 = vector.load %arg6[%c0_59, %c0_60] : memref<120x160xf32, #tpu.memory_space<vmem>>, vector<120x160xf32>
    %cst_61 = arith.constant dense<0.000000e+00> : vector<120x4xf32>
    %61 = tpu.matmul %60, %57, %cst_61 {dimension_numbers = #tpu.dot_dimension_numbers<[1], [0], [0], [1], [0, 0, 1, 1], [], []>} : vector<120x160xf32>, vector<160x4xf32>, vector<120x4xf32> -> vector<120x4xf32>
    %62 = arith.mulf %59, %61 : vector<120x4xf32>
    %cst_62 = arith.constant dense<0.000000e+00> : vector<120xf32>
    %63 = vector.multi_reduction <add>, %62, %cst_62 [1] : vector<120x4xf32> to vector<120xf32>
    %64 = vector.shape_cast %63 : vector<120xf32> to vector<120x1xf32>
    %c0_63 = arith.constant 0 : index
    %c0_64 = arith.constant 0 : index
    %65 = vector.load %arg7[%c0_63, %c0_64] : memref<120x6xf32, #tpu.memory_space<vmem>>, vector<120x6xf32>
    %66 = vector.broadcast %64 : vector<120x1xf32> to vector<120x6xf32>
    %67 = arith.mulf %66, %65 : vector<120x6xf32>
    %c0_65 = arith.constant 0 : index
    %c0_66 = arith.constant 0 : index
    %68 = vector.load %arg8[%c0_65, %c0_66] : memref<10x120xf32, #tpu.memory_space<vmem>>, vector<10x120xf32>
    %cst_67 = arith.constant dense<0.000000e+00> : vector<10x6xf32>
    %69 = tpu.matmul %68, %67, %cst_67 {dimension_numbers = #tpu.dot_dimension_numbers<[1], [0], [0], [1], [0, 0, 1, 1], [], []>} : vector<10x120xf32>, vector<120x6xf32>, vector<10x6xf32> -> vector<10x6xf32>
    %cst_68 = arith.constant dense<0xFF800000> : vector<10xf32>
    %70 = vector.multi_reduction <maximumf>, %69, %cst_68 [1] : vector<10x6xf32> to vector<10xf32>
    %71 = vector.shape_cast %70 : vector<10xf32> to vector<10x1xf32>
    %72 = vector.broadcast %71 : vector<10x1xf32> to vector<10x6xf32>
    %73 = arith.subf %69, %72 : vector<10x6xf32>
    %74 = math.exp %73 : vector<10x6xf32>
    %cst_69 = arith.constant dense<0.000000e+00> : vector<10xf32>
    %75 = vector.multi_reduction <add>, %74, %cst_69 [1] : vector<10x6xf32> to vector<10xf32>
    %76 = vector.shape_cast %75 : vector<10xf32> to vector<10x1xf32>
    %77 = vector.broadcast %76 : vector<10x1xf32> to vector<10x6xf32>
    %78 = arith.divf %74, %77 : vector<10x6xf32>
    %c0_70 = arith.constant 0 : index
    %c0_71 = arith.constant 0 : index
    %c0_72 = arith.constant 0 : index
    %79 = vector.load %arg24[%c0_70, %c0_71, %c0_72] : memref<1x10x6xf32, #tpu.memory_space<vmem>>, vector<1x10x6xf32>
    %80 = vector.shape_cast %79 : vector<1x10x6xf32> to vector<10x6xf32>
    %81 = vector.shape_cast %78 : vector<10x6xf32> to vector<1x10x6xf32>
    tpu.vector_store %arg24[%c0_70, %c0_71, %c0_72], %81 {strides = array<i32>} : memref<1x10x6xf32, #tpu.memory_space<vmem>>, vector<1x10x6xf32>,
    return
  }
  func.func @transform_0(%arg0: i32) -> (i32, i32, i32) {
    %c0_i32 = arith.constant 0 : i32
    %c0_i32_0 = arith.constant 0 : i32
    %c0_i32_1 = arith.constant 0 : i32
    return %arg0, %c0_i32, %c0_i32_0 : i32, i32, i32
  }
  func.func @transform_1(%arg0: i32) -> (i32, i32, i32) {
    %c0_i32 = arith.constant 0 : i32
    %c0_i32_0 = arith.constant 0 : i32
    %c0_i32_1 = arith.constant 0 : i32
    return %arg0, %c0_i32, %c0_i32_0 : i32, i32, i32
  }
  func.func @transform_2(%arg0: i32) -> (i32, i32, i32) {
    %c0_i32 = arith.constant 0 : i32
    %c0_i32_0 = arith.constant 0 : i32
    %c0_i32_1 = arith.constant 0 : i32
    return %arg0, %c0_i32, %c0_i32_0 : i32, i32, i32
  }
  func.func @transform_3(%arg0: i32) -> (i32, i32, i32) {
    %c0_i32 = arith.constant 0 : i32
    %c0_i32_0 = arith.constant 0 : i32
    %c0_i32_1 = arith.constant 0 : i32
    return %arg0, %c0_i32, %c0_i32_0 : i32, i32, i32
  }
  func.func @transform_4(%arg0: i32) -> (i32, i32) {
    %c0_i32 = arith.constant 0 : i32
    %c0_i32_0 = arith.constant 0 : i32
    %c0_i32_1 = arith.constant 0 : i32
    return %c0_i32, %c0_i32_0 : i32, i32
  }
  func.func @transform_5(%arg0: i32) -> (i32, i32) {
    %c0_i32 = arith.constant 0 : i32
    %c0_i32_0 = arith.constant 0 : i32
    %c0_i32_1 = arith.constant 0 : i32
    return %c0_i32, %c0_i32_0 : i32, i32
  }
  func.func @transform_6(%arg0: i32) -> (i32, i32) {
    %c0_i32 = arith.constant 0 : i32
    %c0_i32_0 = arith.constant 0 : i32
    %c0_i32_1 = arith.constant 0 : i32
    return %c0_i32, %c0_i32_0 : i32, i32
  }
  func.func @transform_7(%arg0: i32) -> (i32, i32) {
    %c0_i32 = arith.constant 0 : i32
    %c0_i32_0 = arith.constant 0 : i32
    %c0_i32_1 = arith.constant 0 : i32
    return %c0_i32, %c0_i32_0 : i32, i32
  }
  func.func @transform_8(%arg0: i32) -> (i32, i32) {
    %c0_i32 = arith.constant 0 : i32
    %c0_i32_0 = arith.constant 0 : i32
    %c0_i32_1 = arith.constant 0 : i32
    return %c0_i32, %c0_i32_0 : i32, i32
  }
  func.func @transform_9(%arg0: i32) -> (i32, i32) {
    %c0_i32 = arith.constant 0 : i32
    %c0_i32_0 = arith.constant 0 : i32
    %c0_i32_1 = arith.constant 0 : i32
    return %c0_i32, %c0_i32_0 : i32, i32
  }
  func.func @transform_10(%arg0: i32) -> (i32, i32) {
    %c0_i32 = arith.constant 0 : i32
    %c0_i32_0 = arith.constant 0 : i32
    %c0_i32_1 = arith.constant 0 : i32
    return %c0_i32, %c0_i32_0 : i32, i32
  }
  func.func @transform_11(%arg0: i32) -> (i32, i32) {
    %c0_i32 = arith.constant 0 : i32
    %c0_i32_0 = arith.constant 0 : i32
    %c0_i32_1 = arith.constant 0 : i32
    return %c0_i32, %c0_i32_0 : i32, i32
  }
  func.func @transform_12(%arg0: i32) -> (i32, i32) {
    %c0_i32 = arith.constant 0 : i32
    %c0_i32_0 = arith.constant 0 : i32
    %c0_i32_1 = arith.constant 0 : i32
    return %c0_i32, %c0_i32_0 : i32, i32
  }
  func.func @transform_13(%arg0: i32) -> (i32, i32) {
    %c0_i32 = arith.constant 0 : i32
    %c0_i32_0 = arith.constant 0 : i32
    %c0_i32_1 = arith.constant 0 : i32
    return %c0_i32, %c0_i32_0 : i32, i32
  }
  func.func @transform_14(%arg0: i32) -> (i32, i32) {
    %c0_i32 = arith.constant 0 : i32
    %c0_i32_0 = arith.constant 0 : i32
    %c0_i32_1 = arith.constant 0 : i32
    return %c0_i32, %c0_i32_0 : i32, i32
  }
  func.func @transform_15(%arg0: i32) -> (i32, i32) {
    %c0_i32 = arith.constant 0 : i32
    %c0_i32_0 = arith.constant 0 : i32
    %c0_i32_1 = arith.constant 0 : i32
    return %c0_i32, %c0_i32_0 : i32, i32
  }
  func.func @transform_16(%arg0: i32) -> (i32, i32) {
    %c0_i32 = arith.constant 0 : i32
    %c0_i32_0 = arith.constant 0 : i32
    %c0_i32_1 = arith.constant 0 : i32
    return %c0_i32, %c0_i32_0 : i32, i32
  }
  func.func @transform_17(%arg0: i32) -> (i32, i32) {
    %c0_i32 = arith.constant 0 : i32
    %c0_i32_0 = arith.constant 0 : i32
    %c0_i32_1 = arith.constant 0 : i32
    return %c0_i32, %c0_i32_0 : i32, i32
  }
  func.func @transform_18(%arg0: i32) -> (i32, i32) {
    %c0_i32 = arith.constant 0 : i32
    %c0_i32_0 = arith.constant 0 : i32
    %c0_i32_1 = arith.constant 0 : i32
    return %c0_i32, %c0_i32_0 : i32, i32
  }
  func.func @transform_19(%arg0: i32) -> (i32, i32) {
    %c0_i32 = arith.constant 0 : i32
    %c0_i32_0 = arith.constant 0 : i32
    %c0_i32_1 = arith.constant 0 : i32
    return %c0_i32, %c0_i32_0 : i32, i32
  }
  func.func @transform_20(%arg0: i32) -> (i32, i32) {
    %c0_i32 = arith.constant 0 : i32
    %c0_i32_0 = arith.constant 0 : i32
    %c0_i32_1 = arith.constant 0 : i32
    return %c0_i32, %c0_i32_0 : i32, i32
  }
  func.func @transform_21(%arg0: i32) -> (i32, i32) {
    %c0_i32 = arith.constant 0 : i32
    %c0_i32_0 = arith.constant 0 : i32
    %c0_i32_1 = arith.constant 0 : i32
    return %c0_i32, %c0_i32_0 : i32, i32
  }
  func.func @transform_22(%arg0: i32) -> (i32, i32) {
    %c0_i32 = arith.constant 0 : i32
    %c0_i32_0 = arith.constant 0 : i32
    %c0_i32_1 = arith.constant 0 : i32
    return %c0_i32, %c0_i32_0 : i32, i32
  }
  func.func @transform_23(%arg0: i32) -> (i32, i32, i32) {
    %c0_i32 = arith.constant 0 : i32
    %c0_i32_0 = arith.constant 0 : i32
    %c0_i32_1 = arith.constant 0 : i32
    return %arg0, %c0_i32, %c0_i32_0 : i32, i32, i32
  }
}

</mosaic_0001>

<llo_original>
// kernel: tpu_custom_call.1
$region0: #{tpu_custom_call.1}
  #allocation0 [shape = 'u32[]', space=smem, size = 0x4, offset = 0x4, fixed_abs, tag = 'smem constant byte address 0x4 - core index']
  #allocation1 [shape = 'u32[72,128]{1,0:T(1,128)}', space=vmem, size = 0x9000, scoped, tag = 'internal scratch']
  %s0 = inlined_call_operand.vmem [shape: f32[1,160,4], index: 0, kind: input, shape index: {}]
  %s1 = inlined_call_operand.vmem [shape: f32[1,160,160], index: 1, kind: input, shape index: {}]
  %s2 = inlined_call_operand.vmem [shape: f32[1,160,160], index: 2, kind: input, shape index: {}]
  %s3 = inlined_call_operand.hbm [shape: f32[1,160,160], index: 3, kind: input, shape index: {}]
  %s4 = inlined_call_operand.vmem [shape: f32[120,160], index: 4, kind: input, shape index: {}]
  %s5 = inlined_call_operand.vmem [shape: f32[120,160], index: 5, kind: input, shape index: {}]
  %s6 = inlined_call_operand.vmem [shape: f32[120,6], index: 6, kind: input, shape index: {}]
  %s7 = inlined_call_operand.vmem [shape: f32[10,120], index: 7, kind: input, shape index: {}]
  %s8 = inlined_call_operand.vmem [shape: f32[4,32], index: 8, kind: input, shape index: {}]
  %s9 = inlined_call_operand.vmem [shape: f32[4,32], index: 9, kind: input, shape index: {}]
  %s10 = inlined_call_operand.vmem [shape: f32[1,32], index: 10, kind: input, shape index: {}]
  %s11 = inlined_call_operand.vmem [shape: f32[32,32], index: 11, kind: input, shape index: {}]
  %s12 = inlined_call_operand.vmem [shape: f32[32,32], index: 12, kind: input, shape index: {}]
  %s13 = inlined_call_operand.vmem [shape: f32[1,32], index: 13, kind: input, shape index: {}]
  %s14 = inlined_call_operand.vmem [shape: f32[32,32], index: 14, kind: input, shape index: {}]
  %s15 = inlined_call_operand.vmem [shape: f32[32,32], index: 15, kind: input, shape index: {}]
  %s16 = inlined_call_operand.vmem [shape: f32[1,32], index: 16, kind: input, shape index: {}]
  %s17 = inlined_call_operand.vmem [shape: f32[32,32], index: 17, kind: input, shape index: {}]
  %s18 = inlined_call_operand.vmem [shape: f32[1,32], index: 18, kind: input, shape index: {}]
  %s19 = inlined_call_operand.vmem [shape: f32[32,4], index: 19, kind: input, shape index: {}]
  %s20 = inlined_call_operand.vmem [shape: f32[1,4], index: 20, kind: input, shape index: {}]
  %s21 = inlined_call_operand.vmem [shape: f32[32,4], index: 21, kind: input, shape index: {}]
  %s22 = inlined_call_operand.vmem [shape: f32[1,4], index: 22, kind: input, shape index: {}]
  %s23 = inlined_call_operand.vmem [shape: f32[1,10,6], index: 23, kind: output, shape index: {}]
  %s24 = sld [smem:[#allocation0]]
  $region106: #{tpu_custom_call.1} parent=0
    _
  %s26 = ssub.s32 1, %s24
  %s27 = scalar_select 0, %s26, %s24
  $region1: #{tpu_custom_call.1} parent=0
    #allocation2 [shape = 'u8[163840]{0}', space=vmem, size = 0x28000, scoped, tag = 'input window, operand 3, single buffered']
    #allocation3 [shape = 's32[1]{0}', space=sflag, size = 0x4, scoped, tag = 'scoped memory for tpu_custom_call.1']
    %28 = vsyncpa [#allocation3], 0
    // Predicated region
    $region2: #{tpu_custom_call.1} parent=1 // pred_check
      _
    $region3: #{tpu_custom_call.1} parent=1 // pred_check_branch
      %30 = sbr.rel (0) target = $region5
    $region4: #{tpu_custom_call.1} parent=1 // pred_region
      _
    $region5: #{tpu_custom_call.1} parent=1 // pred_fallthru
      _
    // Predicated region
    $region6: #{tpu_custom_call.1} parent=1 // pred_check
      _
    $region7: #{tpu_custom_call.1} parent=1 // pred_check_branch
      %32 = sbr.rel (0) target = $region9
    $region8: #{tpu_custom_call.1} parent=1 // pred_region
      _
    $region9: #{tpu_custom_call.1} parent=1 // pred_fallthru
      _
    // Predicated region
    $region10: #{tpu_custom_call.1} parent=1 // pred_check
      _
    $region11: #{tpu_custom_call.1} parent=1 // pred_check_branch
      %34 = sbr.rel (0) target = $region13
    $region12: #{tpu_custom_call.1} parent=1 // pred_region
      _
    $region13: #{tpu_custom_call.1} parent=1 // pred_fallthru
      _
    // Predicated region
    $region14: #{tpu_custom_call.1} parent=1 // pred_check
      _
    $region15: #{tpu_custom_call.1} parent=1 // pred_check_branch
      %36 = sbr.rel (0) target = $region17
    $region16: #{tpu_custom_call.1} parent=1 // pred_region
      %38 = vsyncadd [#allocation3], 0
      %s39 = sshll.u32 %s3, 4
      %s40 = int_to_ptr.hbm [resolvable:$true] %s39
      %s41 = sshll.u32 [#allocation2], 4
      %s42 = int_to_ptr.vmem [resolvable:$true] %s41
      %47 = dma.hbm_to_vmem [thread:$0]  %s40, 5120, %s42, [#allocation3], 256, 256, 16
    $region17: #{tpu_custom_call.1} parent=1 // pred_fallthru
      _
    // Predicated region
    $region18: #{tpu_custom_call.1} parent=1 // pred_check
      _
    $region19: #{tpu_custom_call.1} parent=1 // pred_check_branch
      %49 = sbr.rel (0) target = $region21
    $region20: #{tpu_custom_call.1} parent=1 // pred_region
      _
    $region21: #{tpu_custom_call.1} parent=1 // pred_fallthru
      _
    // Predicated region
    $region22: #{tpu_custom_call.1} parent=1 // pred_check
      _
    $region23: #{tpu_custom_call.1} parent=1 // pred_check_branch
      %51 = sbr.rel (0) target = $region25
    $region24: #{tpu_custom_call.1} parent=1 // pred_region
      _
    $region25: #{tpu_custom_call.1} parent=1 // pred_fallthru
      _
    // Predicated region
    $region26: #{tpu_custom_call.1} parent=1 // pred_check
      _
    $region27: #{tpu_custom_call.1} parent=1 // pred_check_branch
      %53 = sbr.rel (0) target = $region29
    $region28: #{tpu_custom_call.1} parent=1 // pred_region
      _
    $region29: #{tpu_custom_call.1} parent=1 // pred_fallthru
      _
    // Predicated region
    $region30: #{tpu_custom_call.1} parent=1 // pred_check
      _
    $region31: #{tpu_custom_call.1} parent=1 // pred_check_branch
      %55 = sbr.rel (0) target = $region33
    $region32: #{tpu_custom_call.1} parent=1 // pred_region
      _
    $region33: #{tpu_custom_call.1} parent=1 // pred_fallthru
      _
    // Predicated region
    $region34: #{tpu_custom_call.1} parent=1 // pred_check
      _
    $region35: #{tpu_custom_call.1} parent=1 // pred_check_branch
      %57 = sbr.rel (0) target = $region37
    $region36: #{tpu_custom_call.1} parent=1 // pred_region
      _
    $region37: #{tpu_custom_call.1} parent=1 // pred_fallthru
      _
    // Predicated region
    $region38: #{tpu_custom_call.1} parent=1 // pred_check
      _
    $region39: #{tpu_custom_call.1} parent=1 // pred_check_branch
      %59 = sbr.rel (0) target = $region41
    $region40: #{tpu_custom_call.1} parent=1 // pred_region
      _
    $region41: #{tpu_custom_call.1} parent=1 // pred_fallthru
      _
    // Predicated region
    $region42: #{tpu_custom_call.1} parent=1 // pred_check
      _
    $region43: #{tpu_custom_call.1} parent=1 // pred_check_branch
      %61 = sbr.rel (0) target = $region45
    $region44: #{tpu_custom_call.1} parent=1 // pred_region
      _
    $region45: #{tpu_custom_call.1} parent=1 // pred_fallthru
      _
    // Predicated region
    $region46: #{tpu_custom_call.1} parent=1 // pred_check
      _
    $region47: #{tpu_custom_call.1} parent=1 // pred_check_branch
      %63 = sbr.rel (0) target = $region49
    $region48: #{tpu_custom_call.1} parent=1 // pred_region
      _
    $region49: #{tpu_custom_call.1} parent=1 // pred_fallthru
      _
    // Predicated region
    $region50: #{tpu_custom_call.1} parent=1 // pred_check
      _
    $region51: #{tpu_custom_call.1} parent=1 // pred_check_branch
      %65 = sbr.rel (0) target = $region53
    $region52: #{tpu_custom_call.1} parent=1 // pred_region
      _
    $region53: #{tpu_custom_call.1} parent=1 // pred_fallthru
      _
    // Predicated region
    $region54: #{tpu_custom_call.1} parent=1 // pred_check
      _
    $region55: #{tpu_custom_call.1} parent=1 // pred_check_branch
      %67 = sbr.rel (0) target = $region57
    $region56: #{tpu_custom_call.1} parent=1 // pred_region
      _
    $region57: #{tpu_custom_call.1} parent=1 // pred_fallthru
      _
    // Predicated region
    $region58: #{tpu_custom_call.1} parent=1 // pred_check
      _
    $region59: #{tpu_custom_call.1} parent=1 // pred_check_branch
      %69 = sbr.rel (0) target = $region61
    $region60: #{tpu_custom_call.1} parent=1 // pred_region
      _
    $region61: #{tpu_custom_call.1} parent=1 // pred_fallthru
      _
    // Predicated region
    $region62: #{tpu_custom_call.1} parent=1 // pred_check
      _
    $region63: #{tpu_custom_call.1} parent=1 // pred_check_branch
      %71 = sbr.rel (0) target = $region65
    $region64: #{tpu_custom_call.1} parent=1 // pred_region
      _
    $region65: #{tpu_custom_call.1} parent=1 // pred_fallthru
      _
    // Predicated region
    $region66: #{tpu_custom_call.1} parent=1 // pred_check
      _
    $region67: #{tpu_custom_call.1} parent=1 // pred_check_branch
      %73 = sbr.rel (0) target = $region69
    $region68: #{tpu_custom_call.1} parent=1 // pred_region
      _
    $region69: #{tpu_custom_call.1} parent=1 // pred_fallthru
      _
    // Predicated region
    $region70: #{tpu_custom_call.1} parent=1 // pred_check
      _
    $region71: #{tpu_custom_call.1} parent=1 // pred_check_branch
      %75 = sbr.rel (0) target = $region73
    $region72: #{tpu_custom_call.1} parent=1 // pred_region
      _
    $region73: #{tpu_custom_call.1} parent=1 // pred_fallthru
      _
    // Predicated region
    $region74: #{tpu_custom_call.1} parent=1 // pred_check
      _
    $region75: #{tpu_custom_call.1} parent=1 // pred_check_branch
      %77 = sbr.rel (0) target = $region77
    $region76: #{tpu_custom_call.1} parent=1 // pred_region
      _
    $region77: #{tpu_custom_call.1} parent=1 // pred_fallthru
      _
    // Predicated region
    $region78: #{tpu_custom_call.1} parent=1 // pred_check
      _
    $region79: #{tpu_custom_call.1} parent=1 // pred_check_branch
      %79 = sbr.rel (0) target = $region81
    $region80: #{tpu_custom_call.1} parent=1 // pred_region
      _
    $region81: #{tpu_custom_call.1} parent=1 // pred_fallthru
      _
    // Predicated region
    $region82: #{tpu_custom_call.1} parent=1 // pred_check
      _
    $region83: #{tpu_custom_call.1} parent=1 // pred_check_branch
      %81 = sbr.rel (0) target = $region85
    $region84: #{tpu_custom_call.1} parent=1 // pred_region
      _
    $region85: #{tpu_custom_call.1} parent=1 // pred_fallthru
      _
    // Predicated region
    $region86: #{tpu_custom_call.1} parent=1 // pred_check
      _
    $region87: #{tpu_custom_call.1} parent=1 // pred_check_branch
      %83 = sbr.rel (0) target = $region89
    $region88: #{tpu_custom_call.1} parent=1 // pred_region
      _
    $region89: #{tpu_custom_call.1} parent=1 // pred_fallthru
      _
    // Predicated region
    $region90: #{tpu_custom_call.1} parent=1 // pred_check
      _
    $region91: #{tpu_custom_call.1} parent=1 // pred_check_branch
      %85 = sbr.rel (0) target = $region93
    $region92: #{tpu_custom_call.1} parent=1 // pred_region
      _
    $region93: #{tpu_custom_call.1} parent=1 // pred_fallthru
      _
    // Predicated region
    $region94: #{tpu_custom_call.1} parent=1 // pred_check
      _
    $region95: #{tpu_custom_call.1} parent=1 // pred_check_branch
      %87 = sbr.rel (0) target = $region97
    $region96: #{tpu_custom_call.1} parent=1 // pred_region
      %89 = dma.done [#allocation3], 5120
    $region97: #{tpu_custom_call.1} parent=1 // pred_fallthru
      _
    %v90 = vld [vmem:[%s0] sm:$0xff]
    %v91 = vld [vmem:[%s0 + $0x8] sm:$0xff]
    %v92 = vld [vmem:[%s0 + $0x10] sm:$0xff]
    %v93 = vld [vmem:[%s0 + $0x18] sm:$0xff]
    %v94 = vld [vmem:[%s0 + $0x20] sm:$0xff]
    %v95 = vld [vmem:[%s0 + $0x28] sm:$0xff]
    %v96 = vld [vmem:[%s0 + $0x30] sm:$0xff]
    %v97 = vld [vmem:[%s0 + $0x38] sm:$0xff]
    %v98 = vld [vmem:[%s0 + $0x40] sm:$0xff]
    %v99 = vld [vmem:[%s0 + $0x48] sm:$0xff]
    %v100 = vld [vmem:[%s0 + $0x50] sm:$0xff]
    %v101 = vld [vmem:[%s0 + $0x58] sm:$0xff]
    %v102 = vld [vmem:[%s0 + $0x60] sm:$0xff]
    %v103 = vld [vmem:[%s0 + $0x68] sm:$0xff]
    %v104 = vld [vmem:[%s0 + $0x70] sm:$0xff]
    %v105 = vld [vmem:[%s0 + $0x78] sm:$0xff]
    %v106 = vld [vmem:[%s0 + $0x80] sm:$0xff]
    %v107 = vld [vmem:[%s0 + $0x88] sm:$0xff]
    %v108 = vld [vmem:[%s0 + $0x90] sm:$0xff]
    %v109 = vld [vmem:[%s0 + $0x98] sm:$0xff]
    %v110 = vld [vmem:[%s1] sm:$0xff]
    %v111 = vld [vmem:[%s1 + $0x8] sm:$0xff]
    %v112 = vld [vmem:[%s1 + $0x10] sm:$0xff]
    %v113 = vld [vmem:[%s1 + $0x18] sm:$0xff]
    %v114 = vld [vmem:[%s1 + $0x20] sm:$0xff]
    %v115 = vld [vmem:[%s1 + $0x28] sm:$0xff]
    %v116 = vld [vmem:[%s1 + $0x30] sm:$0xff]
    %v117 = vld [vmem:[%s1 + $0x38] sm:$0xff]
    %v118 = vld [vmem:[%s1 + $0x40] sm:$0xff]
    %v119 = vld [vmem:[%s1 + $0x48] sm:$0xff]
    %v120 = vld [vmem:[%s1 + $0x50] sm:$0xff]
    %v121 = vld [vmem:[%s1 + $0x58] sm:$0xff]
    %v122 = vld [vmem:[%s1 + $0x60] sm:$0xff]
    %v123 = vld [vmem:[%s1 + $0x68] sm:$0xff]
    %v124 = vld [vmem:[%s1 + $0x70] sm:$0xff]
    %v125 = vld [vmem:[%s1 + $0x78] sm:$0xff]
    %v126 = vld [vmem:[%s1 + $0x80] sm:$0xff]
    %v127 = vld [vmem:[%s1 + $0x88] sm:$0xff]
    %v128 = vld [vmem:[%s1 + $0x90] sm:$0xff]
    %v129 = vld [vmem:[%s1 + $0x98] sm:$0xff]
    %v130 = vld [vmem:[%s1 + $0xa0] sm:$0xff]
    %v131 = vld [vmem:[%s1 + $0xa8] sm:$0xff]
    %v132 = vld [vmem:[%s1 + $0xb0] sm:$0xff]
    %v133 = vld [vmem:[%s1 + $0xb8] sm:$0xff]
    %v134 = vld [vmem:[%s1 + $0xc0] sm:$0xff]
    %v135 = vld [vmem:[%s1 + $0xc8] sm:$0xff]
    %v136 = vld [vmem:[%s1 + $0xd0] sm:$0xff]
    %v137 = vld [vmem:[%s1 + $0xd8] sm:$0xff]
    %v138 = vld [vmem:[%s1 + $0xe0] sm:$0xff]
    %v139 = vld [vmem:[%s1 + $0xe8] sm:$0xff]
    %v140 = vld [vmem:[%s1 + $0xf0] sm:$0xff]
    %v141 = vld [vmem:[%s1 + $0xf8] sm:$0xff]
    %v142 = vld [vmem:[%s1 + $0x100] sm:$0xff]
    %v143 = vld [vmem:[%s1 + $0x108] sm:$0xff]
    %v144 = vld [vmem:[%s1 + $0x110] sm:$0xff]
    %v145 = vld [vmem:[%s1 + $0x118] sm:$0xff]
    %v146 = vld [vmem:[%s1 + $0x120] sm:$0xff]
    %v147 = vld [vmem:[%s1 + $0x128] sm:$0xff]
    %v148 = vld [vmem:[%s1 + $0x130] sm:$0xff]
    %v149 = vld [vmem:[%s1 + $0x138] sm:$0xff]
    %vm150 = vcmask 261120
    %v152 = vsel %vm150, %v111, 0
    %v155 = vsel %vm150, %v113, 0
    %v158 = vsel %vm150, %v115, 0
    %v161 = vsel %vm150, %v117, 0
    %v164 = vsel %vm150, %v119, 0
    %v167 = vsel %vm150, %v121, 0
    %v170 = vsel %vm150, %v123, 0
    %v173 = vsel %vm150, %v125, 0
    %v176 = vsel %vm150, %v127, 0
    %v179 = vsel %vm150, %v129, 0
    %v182 = vsel %vm150, %v131, 0
    %v185 = vsel %vm150, %v133, 0
    %v188 = vsel %vm150, %v135, 0
    %v191 = vsel %vm150, %v137, 0
    %v194 = vsel %vm150, %v139, 0
    %v197 = vsel %vm150, %v141, 0
    %v200 = vsel %vm150, %v143, 0
    %v203 = vsel %vm150, %v145, 0
    %v206 = vsel %vm150, %v147, 0
    %v209 = vsel %vm150, %v149, 0
    %211 = vmatpush.msra.mxu0 %v105
    %212 = vmatpush.msra.mxu0 %v104
    %213 = vmatpush.msra.mxu0 %v103
    %214 = vmatpush.msra.mxu0 %v102
    %215 = vmatpush.msra.mxu0 %v101
    %216 = vmatpush.msra.mxu0 %v100
    %217 = vmatpush.msra.mxu0 %v99
    %218 = vmatpush.msra.mxu0 %v98
    %219 = vmatpush.msra.mxu0 %v97
    %220 = vmatpush.msra.mxu0 %v96
    %221 = vmatpush.msra.mxu0 %v95
    %222 = vmatpush.msra.mxu0 %v94
    %223 = vmatpush.msra.mxu0 %v93
    %224 = vmatpush.msra.mxu0 %v92
    %225 = vmatpush.msra.mxu0 %v91
    %226 = vmatpush.msra.mxu0 %v90
    %227 = vmatmul.f32.gmra.mxu0 %v110
    %v228 = vpop.f32.mrf.mxu0
    %v229 = vadd.f32 0.0, %v228
    %230 = vmatmul.f32.gmra.mxu0 %v112
    %v231 = vpop.f32.mrf.mxu0
    %v232 = vadd.f32 0.0, %v231
    %233 = vmatmul.f32.gmra.mxu0 %v114
    %v234 = vpop.f32.mrf.mxu0
    %v235 = vadd.f32 0.0, %v234
    %236 = vmatmul.f32.gmra.mxu0 %v116
    %v237 = vpop.f32.mrf.mxu0
    %v238 = vadd.f32 0.0, %v237
    %239 = vmatmul.f32.gmra.mxu0 %v118
    %v240 = vpop.f32.mrf.mxu0
    %v241 = vadd.f32 0.0, %v240
    %242 = vmatmul.f32.gmra.mxu0 %v120
    %v243 = vpop.f32.mrf.mxu0
    %v244 = vadd.f32 0.0, %v243
    %245 = vmatmul.f32.gmra.mxu0 %v122
    %v246 = vpop.f32.mrf.mxu0
    %v247 = vadd.f32 0.0, %v246
    %248 = vmatmul.f32.gmra.mxu0 %v124
    %v249 = vpop.f32.mrf.mxu0
    %v250 = vadd.f32 0.0, %v249
    %251 = vmatmul.f32.gmra.mxu0 %v126
    %v252 = vpop.f32.mrf.mxu0
    %v253 = vadd.f32 0.0, %v252
    %254 = vmatmul.f32.gmra.mxu0 %v128
    %v255 = vpop.f32.mrf.mxu0
    %v256 = vadd.f32 0.0, %v255
    %257 = vmatmul.f32.gmra.mxu0 %v130
    %v258 = vpop.f32.mrf.mxu0
    %v259 = vadd.f32 0.0, %v258
    %260 = vmatmul.f32.gmra.mxu0 %v132
    %v261 = vpop.f32.mrf.mxu0
    %v262 = vadd.f32 0.0, %v261
    %263 = vmatmul.f32.gmra.mxu0 %v134
    %v264 = vpop.f32.mrf.mxu0
    %v265 = vadd.f32 0.0, %v264
    %266 = vmatmul.f32.gmra.mxu0 %v136
    %v267 = vpop.f32.mrf.mxu0
    %v268 = vadd.f32 0.0, %v267
    %269 = vmatmul.f32.gmra.mxu0 %v138
    %v270 = vpop.f32.mrf.mxu0
    %v271 = vadd.f32 0.0, %v270
    %272 = vmatmul.f32.gmra.mxu0 %v140
    %v273 = vpop.f32.mrf.mxu0
    %v274 = vadd.f32 0.0, %v273
    %275 = vmatmul.f32.gmra.mxu0 %v142
    %v276 = vpop.f32.mrf.mxu0
    %v277 = vadd.f32 0.0, %v276
    %278 = vmatmul.f32.gmra.mxu0 %v144
    %v279 = vpop.f32.mrf.mxu0
    %v280 = vadd.f32 0.0, %v279
    %281 = vmatmul.f32.gmra.mxu0 %v146
    %v282 = vpop.f32.mrf.mxu0
    %v283 = vadd.f32 0.0, %v282
    %284 = vmatmul.f32.gmra.mxu0 %v148
    %v285 = vpop.f32.mrf.mxu0
    %v286 = vadd.f32 0.0, %v285
    %287 = vdwg.mxu0
    %288 = vmatpush.msra.mxu0 0.0
    %289 = vmatpush.msra.mxu0 0.0
    %290 = vmatpush.msra.mxu0 0.0
    %291 = vmatpush.msra.mxu0 0.0
    %292 = vmatpush.msra.mxu0 0.0
    %293 = vmatpush.msra.mxu0 0.0
    %294 = vmatpush.msra.mxu0 0.0
    %295 = vmatpush.msra.mxu0 0.0
    %296 = vmatpush.msra.mxu0 0.0
    %297 = vmatpush.msra.mxu0 0.0
    %298 = vmatpush.msra.mxu0 0.0
    %299 = vmatpush.msra.mxu0 0.0
    %300 = vmatpush.msra.mxu0 %v109
    %301 = vmatpush.msra.mxu0 %v108
    %302 = vmatpush.msra.mxu0 %v107
    %303 = vmatpush.msra.mxu0 %v106
    %304 = vmatmul.f32.gmra.mxu0 %v152
    %v305 = vpop.f32.mrf.mxu0
    %v306 = vadd.f32 %v229, %v305
    %307 = vmatmul.f32.gmra.mxu0 %v155
    %v308 = vpop.f32.mrf.mxu0
    %v309 = vadd.f32 %v232, %v308
    %310 = vmatmul.f32.gmra.mxu0 %v158
    %v311 = vpop.f32.mrf.mxu0
    %v312 = vadd.f32 %v235, %v311
    %313 = vmatmul.f32.gmra.mxu0 %v161
    %v314 = vpop.f32.mrf.mxu0
    %v315 = vadd.f32 %v238, %v314
    %316 = vmatmul.f32.gmra.mxu0 %v164
    %v317 = vpop.f32.mrf.mxu0
    %v318 = vadd.f32 %v241, %v317
    %319 = vmatmul.f32.gmra.mxu0 %v167
    %v320 = vpop.f32.mrf.mxu0
    %v321 = vadd.f32 %v244, %v320
    %322 = vmatmul.f32.gmra.mxu0 %v170
    %v323 = vpop.f32.mrf.mxu0
    %v324 = vadd.f32 %v247, %v323
    %325 = vmatmul.f32.gmra.mxu0 %v173
    %v326 = vpop.f32.mrf.mxu0
    %v327 = vadd.f32 %v250, %v326
    %328 = vmatmul.f32.gmra.mxu0 %v176
    %v329 = vpop.f32.mrf.mxu0
    %v330 = vadd.f32 %v253, %v329
    %331 = vmatmul.f32.gmra.mxu0 %v179
    %v332 = vpop.f32.mrf.mxu0
    %v333 = vadd.f32 %v256, %v332
    %334 = vmatmul.f32.gmra.mxu0 %v182
    %v335 = vpop.f32.mrf.mxu0
    %v336 = vadd.f32 %v259, %v335
    %337 = vmatmul.f32.gmra.mxu0 %v185
    %v338 = vpop.f32.mrf.mxu0
    %v339 = vadd.f32 %v262, %v338
    %340 = vmatmul.f32.gmra.mxu0 %v188
    %v341 = vpop.f32.mrf.mxu0
    %v342 = vadd.f32 %v265, %v341
    %343 = vmatmul.f32.gmra.mxu0 %v191
    %v344 = vpop.f32.mrf.mxu0
    %v345 = vadd.f32 %v268, %v344
    %346 = vmatmul.f32.gmra.mxu0 %v194
    %v347 = vpop.f32.mrf.mxu0
    %v348 = vadd.f32 %v271, %v347
    %349 = vmatmul.f32.gmra.mxu0 %v197
    %v350 = vpop.f32.mrf.mxu0
    %v351 = vadd.f32 %v274, %v350
    %352 = vmatmul.f32.gmra.mxu0 %v200
    %v353 = vpop.f32.mrf.mxu0
    %v354 = vadd.f32 %v277, %v353
    %355 = vmatmul.f32.gmra.mxu0 %v203
    %v356 = vpop.f32.mrf.mxu0
    %v357 = vadd.f32 %v280, %v356
    %358 = vmatmul.f32.gmra.mxu0 %v206
    %v359 = vpop.f32.mrf.mxu0
    %v360 = vadd.f32 %v283, %v359
    %361 = vmatmul.f32.gmra.mxu0 %v209
    %v362 = vpop.f32.mrf.mxu0
    %v363 = vadd.f32 %v286, %v362
    %364 = vdwg.mxu0
    %v365 = vld [vmem:[%s8] sm:$0xf]
    %v366 = vld [vmem:[%s9] sm:$0xf]
    %vm367 = vcmask 31744
    %v369 = vsel %vm367, %v306, 0
    %v372 = vsel %vm367, %v309, 0
    %v375 = vsel %vm367, %v312, 0
    %v378 = vsel %vm367, %v315, 0
    %v381 = vsel %vm367, %v318, 0
    %v384 = vsel %vm367, %v321, 0
    %v387 = vsel %vm367, %v324, 0
    %v390 = vsel %vm367, %v327, 0
    %v393 = vsel %vm367, %v330, 0
    %v396 = vsel %vm367, %v333, 0
    %v399 = vsel %vm367, %v336, 0
    %v402 = vsel %vm367, %v339, 0
    %v405 = vsel %vm367, %v342, 0
    %v408 = vsel %vm367, %v345, 0
    %v411 = vsel %vm367, %v348, 0
    %v414 = vsel %vm367, %v351, 0
    %v417 = vsel %vm367, %v354, 0
    %v420 = vsel %vm367, %v357, 0
    %v423 = vsel %vm367, %v360, 0
    %v426 = vsel %vm367, %v363, 0
    %vm428 = vcmask 1043456
    %v430 = vsel %vm428, %v366, 0
    %432 = vmatpush.msra.mxu0 0.0
    %433 = vmatpush.msra.mxu0 0.0
    %434 = vmatpush.msra.mxu0 0.0
    %435 = vmatpush.msra.mxu0 0.0
    %436 = vmatpush.msra.mxu0 0.0
    %437 = vmatpush.msra.mxu0 0.0
    %438 = vmatpush.msra.mxu0 0.0
    %439 = vmatpush.msra.mxu0 0.0
    %440 = vmatpush.msra.mxu0 0.0
    %441 = vmatpush.msra.mxu0 0.0
    %442 = vmatpush.msra.mxu0 0.0
    %443 = vmatpush.msra.mxu0 0.0
    %444 = vmatpush.msra.mxu0 0.0
    %445 = vmatpush.msra.mxu0 0.0
    %446 = vmatpush.msra.mxu0 0.0
    %447 = vmatpush.msra.mxu0 %v430
    %448 = vmatmul.f32.gmra.mxu0 %v369
    %v449 = vpop.f32.mrf.mxu0
    %v450 = vadd.f32 0.0, %v449
    %451 = vmatmul.f32.gmra.mxu0 %v372
    %v452 = vpop.f32.mrf.mxu0
    %v453 = vadd.f32 0.0, %v452
    %454 = vmatmul.f32.gmra.mxu0 %v375
    %v455 = vpop.f32.mrf.mxu0
    %v456 = vadd.f32 0.0, %v455
    %457 = vmatmul.f32.gmra.mxu0 %v378
    %v458 = vpop.f32.mrf.mxu0
    %v459 = vadd.f32 0.0, %v458
    %460 = vmatmul.f32.gmra.mxu0 %v381
    %v461 = vpop.f32.mrf.mxu0
    %v462 = vadd.f32 0.0, %v461
    %463 = vmatmul.f32.gmra.mxu0 %v384
    %v464 = vpop.f32.mrf.mxu0
    %v465 = vadd.f32 0.0, %v464
    %466 = vmatmul.f32.gmra.mxu0 %v387
    %v467 = vpop.f32.mrf.mxu0
    %v468 = vadd.f32 0.0, %v467
    %469 = vmatmul.f32.gmra.mxu0 %v390
    %v470 = vpop.f32.mrf.mxu0
    %v471 = vadd.f32 0.0, %v470
    %472 = vmatmul.f32.gmra.mxu0 %v393
    %v473 = vpop.f32.mrf.mxu0
    %v474 = vadd.f32 0.0, %v473
    %475 = vmatmul.f32.gmra.mxu0 %v396
    %v476 = vpop.f32.mrf.mxu0
    %v477 = vadd.f32 0.0, %v476
    %478 = vmatmul.f32.gmra.mxu0 %v399
    %v479 = vpop.f32.mrf.mxu0
    %v480 = vadd.f32 0.0, %v479
    %481 = vmatmul.f32.gmra.mxu0 %v402
    %v482 = vpop.f32.mrf.mxu0
    %v483 = vadd.f32 0.0, %v482
    %484 = vmatmul.f32.gmra.mxu0 %v405
    %v485 = vpop.f32.mrf.mxu0
    %v486 = vadd.f32 0.0, %v485
    %487 = vmatmul.f32.gmra.mxu0 %v408
    %v488 = vpop.f32.mrf.mxu0
    %v489 = vadd.f32 0.0, %v488
    %490 = vmatmul.f32.gmra.mxu0 %v411
    %v491 = vpop.f32.mrf.mxu0
    %v492 = vadd.f32 0.0, %v491
    %493 = vmatmul.f32.gmra.mxu0 %v414
    %v494 = vpop.f32.mrf.mxu0
    %v495 = vadd.f32 0.0, %v494
    %496 = vmatmul.f32.gmra.mxu0 %v417
    %v497 = vpop.f32.mrf.mxu0
    %v498 = vadd.f32 0.0, %v497
    %499 = vmatmul.f32.gmra.mxu0 %v420
    %v500 = vpop.f32.mrf.mxu0
    %v501 = vadd.f32 0.0, %v500
    %502 = vmatmul.f32.gmra.mxu0 %v423
    %v503 = vpop.f32.mrf.mxu0
    %v504 = vadd.f32 0.0, %v503
    %505 = vmatmul.f32.gmra.mxu0 %v426
    %v506 = vpop.f32.mrf.mxu0
    %v507 = vadd.f32 0.0, %v506
    %508 = vdwg.mxu0
    %v510 = vsel %vm367, %v90, 0
    %v513 = vsel %vm367, %v91, 0
    %v516 = vsel %vm367, %v92, 0
    %v519 = vsel %vm367, %v93, 0
    %v522 = vsel %vm367, %v94, 0
    %v525 = vsel %vm367, %v95, 0
    %v528 = vsel %vm367, %v96, 0
    %v531 = vsel %vm367, %v97, 0
    %v534 = vsel %vm367, %v98, 0
    %v537 = vsel %vm367, %v99, 0
    %v540 = vsel %vm367, %v100, 0
    %v543 = vsel %vm367, %v101, 0
    %v546 = vsel %vm367, %v102, 0
    %v549 = vsel %vm367, %v103, 0
    %v552 = vsel %vm367, %v104, 0
    %v555 = vsel %vm367, %v105, 0
    %v558 = vsel %vm367, %v106, 0
    %v561 = vsel %vm367, %v107, 0
    %v564 = vsel %vm367, %v108, 0
    %v567 = vsel %vm367, %v109, 0
    %v570 = vsel %vm428, %v365, 0
    %572 = vmatpush.msra.mxu0 0.0
    %573 = vmatpush.msra.mxu0 0.0
    %574 = vmatpush.msra.mxu0 0.0
    %575 = vmatpush.msra.mxu0 0.0
    %576 = vmatpush.msra.mxu0 0.0
    %577 = vmatpush.msra.mxu0 0.0
    %578 = vmatpush.msra.mxu0 0.0
    %579 = vmatpush.msra.mxu0 0.0
    %580 = vmatpush.msra.mxu0 0.0
    %581 = vmatpush.msra.mxu0 0.0
    %582 = vmatpush.msra.mxu0 0.0
    %583 = vmatpush.msra.mxu0 0.0
    %584 = vmatpush.msra.mxu0 0.0
    %585 = vmatpush.msra.mxu0 0.0
    %586 = vmatpush.msra.mxu0 0.0
    %587 = vmatpush.msra.mxu0 %v570
    %588 = vmatmul.f32.gmra.mxu0 %v510
    %v589 = vpop.f32.mrf.mxu0
    %v590 = vadd.f32 %v450, %v589
    %591 = vmatmul.f32.gmra.mxu0 %v513
    %v592 = vpop.f32.mrf.mxu0
    %v593 = vadd.f32 %v453, %v592
    %594 = vmatmul.f32.gmra.mxu0 %v516
    %v595 = vpop.f32.mrf.mxu0
    %v596 = vadd.f32 %v456, %v595
    %597 = vmatmul.f32.gmra.mxu0 %v519
    %v598 = vpop.f32.mrf.mxu0
    %v599 = vadd.f32 %v459, %v598
    %600 = vmatmul.f32.gmra.mxu0 %v522
    %v601 = vpop.f32.mrf.mxu0
    %v602 = vadd.f32 %v462, %v601
    %603 = vmatmul.f32.gmra.mxu0 %v525
    %v604 = vpop.f32.mrf.mxu0
    %v605 = vadd.f32 %v465, %v604
    %606 = vmatmul.f32.gmra.mxu0 %v528
    %v607 = vpop.f32.mrf.mxu0
    %v608 = vadd.f32 %v468, %v607
    %609 = vmatmul.f32.gmra.mxu0 %v531
    %v610 = vpop.f32.mrf.mxu0
    %v611 = vadd.f32 %v471, %v610
    %612 = vmatmul.f32.gmra.mxu0 %v534
    %v613 = vpop.f32.mrf.mxu0
    %v614 = vadd.f32 %v474, %v613
    %615 = vmatmul.f32.gmra.mxu0 %v537
    %v616 = vpop.f32.mrf.mxu0
    %v617 = vadd.f32 %v477, %v616
    %618 = vmatmul.f32.gmra.mxu0 %v540
    %v619 = vpop.f32.mrf.mxu0
    %v620 = vadd.f32 %v480, %v619
    %621 = vmatmul.f32.gmra.mxu0 %v543
    %v622 = vpop.f32.mrf.mxu0
    %v623 = vadd.f32 %v483, %v622
    %624 = vmatmul.f32.gmra.mxu0 %v546
    %v625 = vpop.f32.mrf.mxu0
    %v626 = vadd.f32 %v486, %v625
    %627 = vmatmul.f32.gmra.mxu0 %v549
    %v628 = vpop.f32.mrf.mxu0
    %v629 = vadd.f32 %v489, %v628
    %630 = vmatmul.f32.gmra.mxu0 %v552
    %v631 = vpop.f32.mrf.mxu0
    %v632 = vadd.f32 %v492, %v631
    %633 = vmatmul.f32.gmra.mxu0 %v555
    %v634 = vpop.f32.mrf.mxu0
    %v635 = vadd.f32 %v495, %v634
    %636 = vmatmul.f32.gmra.mxu0 %v558
    %v637 = vpop.f32.mrf.mxu0
    %v638 = vadd.f32 %v498, %v637
    %639 = vmatmul.f32.gmra.mxu0 %v561
    %v640 = vpop.f32.mrf.mxu0
    %v641 = vadd.f32 %v501, %v640
    %642 = vmatmul.f32.gmra.mxu0 %v564
    %v643 = vpop.f32.mrf.mxu0
    %v644 = vadd.f32 %v504, %v643
    %645 = vmatmul.f32.gmra.mxu0 %v567
    %v646 = vpop.f32.mrf.mxu0
    %v647 = vadd.f32 %v507, %v646
    %648 = vdwg.mxu0
    %v649 = vld [vmem:[%s10] sm:$0x1]
    %v651 = vperm.slane %v649, 0
    %v653 = vadd.f32 %v590, %v651
    %v654 = vadd.f32 %v593, %v651
    %v655 = vadd.f32 %v596, %v651
    %v656 = vadd.f32 %v599, %v651
    %v657 = vadd.f32 %v602, %v651
    %v658 = vadd.f32 %v605, %v651
    %v659 = vadd.f32 %v608, %v651
    %v660 = vadd.f32 %v611, %v651
    %v661 = vadd.f32 %v614, %v651
    %v662 = vadd.f32 %v617, %v651
    %v663 = vadd.f32 %v620, %v651
    %v664 = vadd.f32 %v623, %v651
    %v665 = vadd.f32 %v626, %v651
    %v666 = vadd.f32 %v629, %v651
    %v667 = vadd.f32 %v632, %v651
    %v668 = vadd.f32 %v635, %v651
    %v669 = vadd.f32 %v638, %v651
    %v670 = vadd.f32 %v641, %v651
    %v671 = vadd.f32 %v644, %v651
    %v672 = vadd.f32 %v647, %v651
    %v673 = vmax.f32 %v653, 0.0
    %v674 = vmax.f32 %v654, 0.0
    %v675 = vmax.f32 %v655, 0.0
    %v676 = vmax.f32 %v656, 0.0
    %v677 = vmax.f32 %v657, 0.0
    %v678 = vmax.f32 %v658, 0.0
    %v679 = vmax.f32 %v659, 0.0
    %v680 = vmax.f32 %v660, 0.0
    %v681 = vmax.f32 %v661, 0.0
    %v682 = vmax.f32 %v662, 0.0
    %v683 = vmax.f32 %v663, 0.0
    %v684 = vmax.f32 %v664, 0.0
    %v685 = vmax.f32 %v665, 0.0
    %v686 = vmax.f32 %v666, 0.0
    %v687 = vmax.f32 %v667, 0.0
    %v688 = vmax.f32 %v668, 0.0
    %v689 = vmax.f32 %v669, 0.0
    %v690 = vmax.f32 %v670, 0.0
    %v691 = vmax.f32 %v671, 0.0
    %v692 = vmax.f32 %v672, 0.0
    %v693 = vld [vmem:[%s2] sm:$0xff]
    %v694 = vld [vmem:[%s2 + $0x8] sm:$0xff]
    %v695 = vld [vmem:[%s2 + $0x10] sm:$0xff]
    %v696 = vld [vmem:[%s2 + $0x18] sm:$0xff]
    %v697 = vld [vmem:[%s2 + $0x20] sm:$0xff]
    %v698 = vld [vmem:[%s2 + $0x28] sm:$0xff]
    %v699 = vld [vmem:[%s2 + $0x30] sm:$0xff]
    %v700 = vld [vmem:[%s2 + $0x38] sm:$0xff]
    %v701 = vld [vmem:[%s2 + $0x40] sm:$0xff]
    %v702 = vld [vmem:[%s2 + $0x48] sm:$0xff]
    %v703 = vld [vmem:[%s2 + $0x50] sm:$0xff]
    %v704 = vld [vmem:[%s2 + $0x58] sm:$0xff]
    %v705 = vld [vmem:[%s2 + $0x60] sm:$0xff]
    %v706 = vld [vmem:[%s2 + $0x68] sm:$0xff]
    %v707 = vld [vmem:[%s2 + $0x70] sm:$0xff]
    %v708 = vld [vmem:[%s2 + $0x78] sm:$0xff]
    %v709 = vld [vmem:[%s2 + $0x80] sm:$0xff]
    %v710 = vld [vmem:[%s2 + $0x88] sm:$0xff]
    %v711 = vld [vmem:[%s2 + $0x90] sm:$0xff]
    %v712 = vld [vmem:[%s2 + $0x98] sm:$0xff]
    %v713 = vld [vmem:[%s2 + $0xa0] sm:$0xff]
    %v714 = vld [vmem:[%s2 + $0xa8] sm:$0xff]
    %v715 = vld [vmem:[%s2 + $0xb0] sm:$0xff]
    %v716 = vld [vmem:[%s2 + $0xb8] sm:$0xff]
    %v717 = vld [vmem:[%s2 + $0xc0] sm:$0xff]
    %v718 = vld [vmem:[%s2 + $0xc8] sm:$0xff]
    %v719 = vld [vmem:[%s2 + $0xd0] sm:$0xff]
    %v720 = vld [vmem:[%s2 + $0xd8] sm:$0xff]
    %v721 = vld [vmem:[%s2 + $0xe0] sm:$0xff]
    %v722 = vld [vmem:[%s2 + $0xe8] sm:$0xff]
    %v723 = vld [vmem:[%s2 + $0xf0] sm:$0xff]
    %v724 = vld [vmem:[%s2 + $0xf8] sm:$0xff]
    %v725 = vld [vmem:[%s2 + $0x100] sm:$0xff]
    %v726 = vld [vmem:[%s2 + $0x108] sm:$0xff]
    %v727 = vld [vmem:[%s2 + $0x110] sm:$0xff]
    %v728 = vld [vmem:[%s2 + $0x118] sm:$0xff]
    %v729 = vld [vmem:[%s2 + $0x120] sm:$0xff]
    %v730 = vld [vmem:[%s2 + $0x128] sm:$0xff]
    %v731 = vld [vmem:[%s2 + $0x130] sm:$0xff]
    %v732 = vld [vmem:[%s2 + $0x138] sm:$0xff]
    %v734 = vsel %vm150, %v694, 0
    %v737 = vsel %vm150, %v696, 0
    %v740 = vsel %vm150, %v698, 0
    %v743 = vsel %vm150, %v700, 0
    %v746 = vsel %vm150, %v702, 0
    %v749 = vsel %vm150, %v704, 0
    %v752 = vsel %vm150, %v706, 0
    %v755 = vsel %vm150, %v708, 0
    %v758 = vsel %vm150, %v710, 0
    %v761 = vsel %vm150, %v712, 0
    %v764 = vsel %vm150, %v714, 0
    %v767 = vsel %vm150, %v716, 0
    %v770 = vsel %vm150, %v718, 0
    %v773 = vsel %vm150, %v720, 0
    %v776 = vsel %vm150, %v722, 0
    %v779 = vsel %vm150, %v724, 0
    %v782 = vsel %vm150, %v726, 0
    %v785 = vsel %vm150, %v728, 0
    %v788 = vsel %vm150, %v730, 0
    %v791 = vsel %vm150, %v732, 0
    %793 = vmatpush.msra.mxu0 %v688
    %794 = vmatpush.msra.mxu0 %v687
    %795 = vmatpush.msra.mxu0 %v686
    %796 = vmatpush.msra.mxu0 %v685
    %797 = vmatpush.msra.mxu0 %v684
    %798 = vmatpush.msra.mxu0 %v683
    %799 = vmatpush.msra.mxu0 %v682
    %800 = vmatpush.msra.mxu0 %v681
    %801 = vmatpush.msra.mxu0 %v680
    %802 = vmatpush.msra.mxu0 %v679
    %803 = vmatpush.msra.mxu0 %v678
    %804 = vmatpush.msra.mxu0 %v677
    %805 = vmatpush.msra.mxu0 %v676
    %806 = vmatpush.msra.mxu0 %v675
    %807 = vmatpush.msra.mxu0 %v674
    %808 = vmatpush.msra.mxu0 %v673
    %809 = vmatmul.f32.gmra.mxu0 %v693
    %v810 = vpop.f32.mrf.mxu0
    %v811 = vadd.f32 0.0, %v810
    %812 = vmatmul.f32.gmra.mxu0 %v695
    %v813 = vpop.f32.mrf.mxu0
    %v814 = vadd.f32 0.0, %v813
    %815 = vmatmul.f32.gmra.mxu0 %v697
    %v816 = vpop.f32.mrf.mxu0
    %v817 = vadd.f32 0.0, %v816
    %818 = vmatmul.f32.gmra.mxu0 %v699
    %v819 = vpop.f32.mrf.mxu0
    %v820 = vadd.f32 0.0, %v819
    %821 = vmatmul.f32.gmra.mxu0 %v701
    %v822 = vpop.f32.mrf.mxu0
    %v823 = vadd.f32 0.0, %v822
    %824 = vmatmul.f32.gmra.mxu0 %v703
    %v825 = vpop.f32.mrf.mxu0
    %v826 = vadd.f32 0.0, %v825
    %827 = vmatmul.f32.gmra.mxu0 %v705
    %v828 = vpop.f32.mrf.mxu0
    %v829 = vadd.f32 0.0, %v828
    %830 = vmatmul.f32.gmra.mxu0 %v707
    %v831 = vpop.f32.mrf.mxu0
    %v832 = vadd.f32 0.0, %v831
    %833 = vmatmul.f32.gmra.mxu0 %v709
    %v834 = vpop.f32.mrf.mxu0
    %v835 = vadd.f32 0.0, %v834
    %836 = vmatmul.f32.gmra.mxu0 %v711
    %v837 = vpop.f32.mrf.mxu0
    %v838 = vadd.f32 0.0, %v837
    %839 = vmatmul.f32.gmra.mxu0 %v713
    %v840 = vpop.f32.mrf.mxu0
    %v841 = vadd.f32 0.0, %v840
    %842 = vmatmul.f32.gmra.mxu0 %v715
    %v843 = vpop.f32.mrf.mxu0
    %v844 = vadd.f32 0.0, %v843
    %845 = vmatmul.f32.gmra.mxu0 %v717
    %v846 = vpop.f32.mrf.mxu0
    %v847 = vadd.f32 0.0, %v846
    %848 = vmatmul.f32.gmra.mxu0 %v719
    %v849 = vpop.f32.mrf.mxu0
    %v850 = vadd.f32 0.0, %v849
    %851 = vmatmul.f32.gmra.mxu0 %v721
    %v852 = vpop.f32.mrf.mxu0
    %v853 = vadd.f32 0.0, %v852
    %854 = vmatmul.f32.gmra.mxu0 %v723
    %v855 = vpop.f32.mrf.mxu0
    %v856 = vadd.f32 0.0, %v855
    %857 = vmatmul.f32.gmra.mxu0 %v725
    %v858 = vpop.f32.mrf.mxu0
    %v859 = vadd.f32 0.0, %v858
    %860 = vmatmul.f32.gmra.mxu0 %v727
    %v861 = vpop.f32.mrf.mxu0
    %v862 = vadd.f32 0.0, %v861
    %863 = vmatmul.f32.gmra.mxu0 %v729
    %v864 = vpop.f32.mrf.mxu0
    %v865 = vadd.f32 0.0, %v864
    %866 = vmatmul.f32.gmra.mxu0 %v731
    %v867 = vpop.f32.mrf.mxu0
    %v868 = vadd.f32 0.0, %v867
    %869 = vdwg.mxu0
    %870 = vmatpush.msra.mxu0 0.0
    %871 = vmatpush.msra.mxu0 0.0
    %872 = vmatpush.msra.mxu0 0.0
    %873 = vmatpush.msra.mxu0 0.0
    %874 = vmatpush.msra.mxu0 0.0
    %875 = vmatpush.msra.mxu0 0.0
    %876 = vmatpush.msra.mxu0 0.0
    %877 = vmatpush.msra.mxu0 0.0
    %878 = vmatpush.msra.mxu0 0.0
    %879 = vmatpush.msra.mxu0 0.0
    %880 = vmatpush.msra.mxu0 0.0
    %881 = vmatpush.msra.mxu0 0.0
    %882 = vmatpush.msra.mxu0 %v692
    %883 = vmatpush.msra.mxu0 %v691
    %884 = vmatpush.msra.mxu0 %v690
    %885 = vmatpush.msra.mxu0 %v689
    %886 = vmatmul.f32.gmra.mxu0 %v734
    %v887 = vpop.f32.mrf.mxu0
    %v888 = vadd.f32 %v811, %v887
    %889 = vmatmul.f32.gmra.mxu0 %v737
    %v890 = vpop.f32.mrf.mxu0
    %v891 = vadd.f32 %v814, %v890
    %892 = vmatmul.f32.gmra.mxu0 %v740
    %v893 = vpop.f32.mrf.mxu0
    %v894 = vadd.f32 %v817, %v893
    %895 = vmatmul.f32.gmra.mxu0 %v743
    %v896 = vpop.f32.mrf.mxu0
    %v897 = vadd.f32 %v820, %v896
    %898 = vmatmul.f32.gmra.mxu0 %v746
    %v899 = vpop.f32.mrf.mxu0
    %v900 = vadd.f32 %v823, %v899
    %901 = vmatmul.f32.gmra.mxu0 %v749
    %v902 = vpop.f32.mrf.mxu0
    %v903 = vadd.f32 %v826, %v902
    %904 = vmatmul.f32.gmra.mxu0 %v752
    %v905 = vpop.f32.mrf.mxu0
    %v906 = vadd.f32 %v829, %v905
    %907 = vmatmul.f32.gmra.mxu0 %v755
    %v908 = vpop.f32.mrf.mxu0
    %v909 = vadd.f32 %v832, %v908
    %910 = vmatmul.f32.gmra.mxu0 %v758
    %v911 = vpop.f32.mrf.mxu0
    %v912 = vadd.f32 %v835, %v911
    %913 = vmatmul.f32.gmra.mxu0 %v761
    %v914 = vpop.f32.mrf.mxu0
    %v915 = vadd.f32 %v838, %v914
    %916 = vmatmul.f32.gmra.mxu0 %v764
    %v917 = vpop.f32.mrf.mxu0
    %v918 = vadd.f32 %v841, %v917
    %919 = vmatmul.f32.gmra.mxu0 %v767
    %v920 = vpop.f32.mrf.mxu0
    %v921 = vadd.f32 %v844, %v920
    %922 = vmatmul.f32.gmra.mxu0 %v770
    %v923 = vpop.f32.mrf.mxu0
    %v924 = vadd.f32 %v847, %v923
    %925 = vmatmul.f32.gmra.mxu0 %v773
    %v926 = vpop.f32.mrf.mxu0
    %v927 = vadd.f32 %v850, %v926
    %928 = vmatmul.f32.gmra.mxu0 %v776
    %v929 = vpop.f32.mrf.mxu0
    %v930 = vadd.f32 %v853, %v929
    %931 = vmatmul.f32.gmra.mxu0 %v779
    %v932 = vpop.f32.mrf.mxu0
    %v933 = vadd.f32 %v856, %v932
    %934 = vmatmul.f32.gmra.mxu0 %v782
    %v935 = vpop.f32.mrf.mxu0
    %v936 = vadd.f32 %v859, %v935
    %937 = vmatmul.f32.gmra.mxu0 %v785
    %v938 = vpop.f32.mrf.mxu0
    %v939 = vadd.f32 %v862, %v938
    %940 = vmatmul.f32.gmra.mxu0 %v788
    %v941 = vpop.f32.mrf.mxu0
    %v942 = vadd.f32 %v865, %v941
    %943 = vmatmul.f32.gmra.mxu0 %v791
    %v944 = vpop.f32.mrf.mxu0
    %v945 = vadd.f32 %v868, %v944
    %946 = vdwg.mxu0
    %v947 = vld [vmem:[%s11] sm:$0xff]
    %v948 = vld [vmem:[%s11 + $0x8] sm:$0xff]
    %v949 = vld [vmem:[%s11 + $0x10] sm:$0xff]
    %v950 = vld [vmem:[%s11 + $0x18] sm:$0xff]
    %v951 = vld [vmem:[%s12] sm:$0xff]
    %v952 = vld [vmem:[%s12 + $0x8] sm:$0xff]
    %v953 = vld [vmem:[%s12 + $0x10] sm:$0xff]
    %v954 = vld [vmem:[%s12 + $0x18] sm:$0xff]
    %v956 = vsel %vm150, %v888, 0
    %v959 = vsel %vm150, %v891, 0
    %v962 = vsel %vm150, %v894, 0
    %v965 = vsel %vm150, %v897, 0
    %v968 = vsel %vm150, %v900, 0
    %v971 = vsel %vm150, %v903, 0
    %v974 = vsel %vm150, %v906, 0
    %v977 = vsel %vm150, %v909, 0
    %v980 = vsel %vm150, %v912, 0
    %v983 = vsel %vm150, %v915, 0
    %v986 = vsel %vm150, %v918, 0
    %v989 = vsel %vm150, %v921, 0
    %v992 = vsel %vm150, %v924, 0
    %v995 = vsel %vm150, %v927, 0
    %v998 = vsel %vm150, %v930, 0
    %v1001 = vsel %vm150, %v933, 0
    %v1004 = vsel %vm150, %v936, 0
    %v1007 = vsel %vm150, %v939, 0
    %v1010 = vsel %vm150, %v942, 0
    %v1013 = vsel %vm150, %v945, 0
    %1015 = vmatpush.msra.mxu0 0.0
    %1016 = vmatpush.msra.mxu0 0.0
    %1017 = vmatpush.msra.mxu0 0.0
    %1018 = vmatpush.msra.mxu0 0.0
    %1019 = vmatpush.msra.mxu0 0.0
    %1020 = vmatpush.msra.mxu0 0.0
    %1021 = vmatpush.msra.mxu0 0.0
    %1022 = vmatpush.msra.mxu0 0.0
    %1023 = vmatpush.msra.mxu0 0.0
    %1024 = vmatpush.msra.mxu0 0.0
    %1025 = vmatpush.msra.mxu0 0.0
    %1026 = vmatpush.msra.mxu0 0.0
    %1027 = vmatpush.msra.mxu0 %v954
    %1028 = vmatpush.msra.mxu0 %v953
    %1029 = vmatpush.msra.mxu0 %v952
    %1030 = vmatpush.msra.mxu0 %v951
    %1031 = vmatmul.f32.gmra.mxu0 %v956
    %v1032 = vpop.f32.mrf.mxu0
    %v1033 = vadd.f32 0.0, %v1032
    %1034 = vmatmul.f32.gmra.mxu0 %v959
    %v1035 = vpop.f32.mrf.mxu0
    %v1036 = vadd.f32 0.0, %v1035
    %1037 = vmatmul.f32.gmra.mxu0 %v962
    %v1038 = vpop.f32.mrf.mxu0
    %v1039 = vadd.f32 0.0, %v1038
    %1040 = vmatmul.f32.gmra.mxu0 %v965
    %v1041 = vpop.f32.mrf.mxu0
    %v1042 = vadd.f32 0.0, %v1041
    %1043 = vmatmul.f32.gmra.mxu0 %v968
    %v1044 = vpop.f32.mrf.mxu0
    %v1045 = vadd.f32 0.0, %v1044
    %1046 = vmatmul.f32.gmra.mxu0 %v971
    %v1047 = vpop.f32.mrf.mxu0
    %v1048 = vadd.f32 0.0, %v1047
    %1049 = vmatmul.f32.gmra.mxu0 %v974
    %v1050 = vpop.f32.mrf.mxu0
    %v1051 = vadd.f32 0.0, %v1050
    %1052 = vmatmul.f32.gmra.mxu0 %v977
    %v1053 = vpop.f32.mrf.mxu0
    %v1054 = vadd.f32 0.0, %v1053
    %1055 = vmatmul.f32.gmra.mxu0 %v980
    %v1056 = vpop.f32.mrf.mxu0
    %v1057 = vadd.f32 0.0, %v1056
    %1058 = vmatmul.f32.gmra.mxu0 %v983
    %v1059 = vpop.f32.mrf.mxu0
    %v1060 = vadd.f32 0.0, %v1059
    %1061 = vmatmul.f32.gmra.mxu0 %v986
    %v1062 = vpop.f32.mrf.mxu0
    %v1063 = vadd.f32 0.0, %v1062
    %1064 = vmatmul.f32.gmra.mxu0 %v989
    %v1065 = vpop.f32.mrf.mxu0
    %v1066 = vadd.f32 0.0, %v1065
    %1067 = vmatmul.f32.gmra.mxu0 %v992
    %v1068 = vpop.f32.mrf.mxu0
    %v1069 = vadd.f32 0.0, %v1068
    %1070 = vmatmul.f32.gmra.mxu0 %v995
    %v1071 = vpop.f32.mrf.mxu0
    %v1072 = vadd.f32 0.0, %v1071
    %1073 = vmatmul.f32.gmra.mxu0 %v998
    %v1074 = vpop.f32.mrf.mxu0
    %v1075 = vadd.f32 0.0, %v1074
    %1076 = vmatmul.f32.gmra.mxu0 %v1001
    %v1077 = vpop.f32.mrf.mxu0
    %v1078 = vadd.f32 0.0, %v1077
    %1079 = vmatmul.f32.gmra.mxu0 %v1004
    %v1080 = vpop.f32.mrf.mxu0
    %v1081 = vadd.f32 0.0, %v1080
    %1082 = vmatmul.f32.gmra.mxu0 %v1007
    %v1083 = vpop.f32.mrf.mxu0
    %v1084 = vadd.f32 0.0, %v1083
    %1085 = vmatmul.f32.gmra.mxu0 %v1010
    %v1086 = vpop.f32.mrf.mxu0
    %v1087 = vadd.f32 0.0, %v1086
    %1088 = vmatmul.f32.gmra.mxu0 %v1013
    %v1089 = vpop.f32.mrf.mxu0
    %v1090 = vadd.f32 0.0, %v1089
    %1091 = vdwg.mxu0
    %v1093 = vsel %vm150, %v673, 0
    %v1096 = vsel %vm150, %v674, 0
    %v1099 = vsel %vm150, %v675, 0
    %v1102 = vsel %vm150, %v676, 0
    %v1105 = vsel %vm150, %v677, 0
    %v1108 = vsel %vm150, %v678, 0
    %v1111 = vsel %vm150, %v679, 0
    %v1114 = vsel %vm150, %v680, 0
    %v1117 = vsel %vm150, %v681, 0
    %v1120 = vsel %vm150, %v682, 0
    %v1123 = vsel %vm150, %v683, 0
    %v1126 = vsel %vm150, %v684, 0
    %v1129 = vsel %vm150, %v685, 0
    %v1132 = vsel %vm150, %v686, 0
    %v1135 = vsel %vm150, %v687, 0
    %v1138 = vsel %vm150, %v688, 0
    %v1141 = vsel %vm150, %v689, 0
    %v1144 = vsel %vm150, %v690, 0
    %v1147 = vsel %vm150, %v691, 0
    %v1150 = vsel %vm150, %v692, 0
    %1152 = vmatpush.msra.mxu0 0.0
    %1153 = vmatpush.msra.mxu0 0.0
    %1154 = vmatpush.msra.mxu0 0.0
    %1155 = vmatpush.msra.mxu0 0.0
    %1156 = vmatpush.msra.mxu0 0.0
    %1157 = vmatpush.msra.mxu0 0.0
    %1158 = vmatpush.msra.mxu0 0.0
    %1159 = vmatpush.msra.mxu0 0.0
    %1160 = vmatpush.msra.mxu0 0.0
    %1161 = vmatpush.msra.mxu0 0.0
    %1162 = vmatpush.msra.mxu0 0.0
    %1163 = vmatpush.msra.mxu0 0.0
    %1164 = vmatpush.msra.mxu0 %v950
    %1165 = vmatpush.msra.mxu0 %v949
    %1166 = vmatpush.msra.mxu0 %v948
    %1167 = vmatpush.msra.mxu0 %v947
    %1168 = vmatmul.f32.gmra.mxu0 %v1093
    %v1169 = vpop.f32.mrf.mxu0
    %v1170 = vadd.f32 %v1033, %v1169
    %1171 = vmatmul.f32.gmra.mxu0 %v1096
    %v1172 = vpop.f32.mrf.mxu0
    %v1173 = vadd.f32 %v1036, %v1172
    %1174 = vmatmul.f32.gmra.mxu0 %v1099
    %v1175 = vpop.f32.mrf.mxu0
    %v1176 = vadd.f32 %v1039, %v1175
    %1177 = vmatmul.f32.gmra.mxu0 %v1102
    %v1178 = vpop.f32.mrf.mxu0
    %v1179 = vadd.f32 %v1042, %v1178
    %1180 = vmatmul.f32.gmra.mxu0 %v1105
    %v1181 = vpop.f32.mrf.mxu0
    %v1182 = vadd.f32 %v1045, %v1181
    %1183 = vmatmul.f32.gmra.mxu0 %v1108
    %v1184 = vpop.f32.mrf.mxu0
    %v1185 = vadd.f32 %v1048, %v1184
    %1186 = vmatmul.f32.gmra.mxu0 %v1111
    %v1187 = vpop.f32.mrf.mxu0
    %v1188 = vadd.f32 %v1051, %v1187
    %1189 = vmatmul.f32.gmra.mxu0 %v1114
    %v1190 = vpop.f32.mrf.mxu0
    %v1191 = vadd.f32 %v1054, %v1190
    %1192 = vmatmul.f32.gmra.mxu0 %v1117
    %v1193 = vpop.f32.mrf.mxu0
    %v1194 = vadd.f32 %v1057, %v1193
    %1195 = vmatmul.f32.gmra.mxu0 %v1120
    %v1196 = vpop.f32.mrf.mxu0
    %v1197 = vadd.f32 %v1060, %v1196
    %1198 = vmatmul.f32.gmra.mxu0 %v1123
    %v1199 = vpop.f32.mrf.mxu0
    %v1200 = vadd.f32 %v1063, %v1199
    %1201 = vmatmul.f32.gmra.mxu0 %v1126
    %v1202 = vpop.f32.mrf.mxu0
    %v1203 = vadd.f32 %v1066, %v1202
    %1204 = vmatmul.f32.gmra.mxu0 %v1129
    %v1205 = vpop.f32.mrf.mxu0
    %v1206 = vadd.f32 %v1069, %v1205
    %1207 = vmatmul.f32.gmra.mxu0 %v1132
    %v1208 = vpop.f32.mrf.mxu0
    %v1209 = vadd.f32 %v1072, %v1208
    %1210 = vmatmul.f32.gmra.mxu0 %v1135
    %v1211 = vpop.f32.mrf.mxu0
    %v1212 = vadd.f32 %v1075, %v1211
    %1213 = vmatmul.f32.gmra.mxu0 %v1138
    %v1214 = vpop.f32.mrf.mxu0
    %v1215 = vadd.f32 %v1078, %v1214
    %1216 = vmatmul.f32.gmra.mxu0 %v1141
    %v1217 = vpop.f32.mrf.mxu0
    %v1218 = vadd.f32 %v1081, %v1217
    %1219 = vmatmul.f32.gmra.mxu0 %v1144
    %v1220 = vpop.f32.mrf.mxu0
    %v1221 = vadd.f32 %v1084, %v1220
    %1222 = vmatmul.f32.gmra.mxu0 %v1147
    %v1223 = vpop.f32.mrf.mxu0
    %v1224 = vadd.f32 %v1087, %v1223
    %1225 = vmatmul.f32.gmra.mxu0 %v1150
    %v1226 = vpop.f32.mrf.mxu0
    %v1227 = vadd.f32 %v1090, %v1226
    %1228 = vdwg.mxu0
    %v1229 = vld [vmem:[%s13] sm:$0x1]
    %v1231 = vperm.slane %v1229, 0
    %v1233 = vadd.f32 %v1170, %v1231
    %v1234 = vadd.f32 %v1173, %v1231
    %v1235 = vadd.f32 %v1176, %v1231
    %v1236 = vadd.f32 %v1179, %v1231
    %v1237 = vadd.f32 %v1182, %v1231
    %v1238 = vadd.f32 %v1185, %v1231
    %v1239 = vadd.f32 %v1188, %v1231
    %v1240 = vadd.f32 %v1191, %v1231
    %v1241 = vadd.f32 %v1194, %v1231
    %v1242 = vadd.f32 %v1197, %v1231
    %v1243 = vadd.f32 %v1200, %v1231
    %v1244 = vadd.f32 %v1203, %v1231
    %v1245 = vadd.f32 %v1206, %v1231
    %v1246 = vadd.f32 %v1209, %v1231
    %v1247 = vadd.f32 %v1212, %v1231
    %v1248 = vadd.f32 %v1215, %v1231
    %v1249 = vadd.f32 %v1218, %v1231
    %v1250 = vadd.f32 %v1221, %v1231
    %v1251 = vadd.f32 %v1224, %v1231
    %v1252 = vadd.f32 %v1227, %v1231
    %v1253 = vmax.f32 %v1233, 0.0
    %v1254 = vmax.f32 %v1234, 0.0
    %v1255 = vmax.f32 %v1235, 0.0
    %v1256 = vmax.f32 %v1236, 0.0
    %v1257 = vmax.f32 %v1237, 0.0
    %v1258 = vmax.f32 %v1238, 0.0
    %v1259 = vmax.f32 %v1239, 0.0
    %v1260 = vmax.f32 %v1240, 0.0
    %v1261 = vmax.f32 %v1241, 0.0
    %v1262 = vmax.f32 %v1242, 0.0
    %v1263 = vmax.f32 %v1243, 0.0
    %v1264 = vmax.f32 %v1244, 0.0
    %v1265 = vmax.f32 %v1245, 0.0
    %v1266 = vmax.f32 %v1246, 0.0
    %v1267 = vmax.f32 %v1247, 0.0
    %v1268 = vmax.f32 %v1248, 0.0
    %v1269 = vmax.f32 %v1249, 0.0
    %v1270 = vmax.f32 %v1250, 0.0
    %v1271 = vmax.f32 %v1251, 0.0
    %v1272 = vmax.f32 %v1252, 0.0
    %v1273 = vld [vmem:[#allocation2] sm:$0xff]
    %v1274 = vld [vmem:[#allocation2 + $0x8] sm:$0xff]
    %v1275 = vld [vmem:[#allocation2 + $0x10] sm:$0xff]
    %v1276 = vld [vmem:[#allocation2 + $0x18] sm:$0xff]
    %v1277 = vld [vmem:[#allocation2 + $0x20] sm:$0xff]
    %v1278 = vld [vmem:[#allocation2 + $0x28] sm:$0xff]
    %v1279 = vld [vmem:[#allocation2 + $0x30] sm:$0xff]
    %v1280 = vld [vmem:[#allocation2 + $0x38] sm:$0xff]
    %v1281 = vld [vmem:[#allocation2 + $0x40] sm:$0xff]
    %v1282 = vld [vmem:[#allocation2 + $0x48] sm:$0xff]
    %v1283 = vld [vmem:[#allocation2 + $0x50] sm:$0xff]
    %v1284 = vld [vmem:[#allocation2 + $0x58] sm:$0xff]
    %v1285 = vld [vmem:[#allocation2 + $0x60] sm:$0xff]
    %v1286 = vld [vmem:[#allocation2 + $0x68] sm:$0xff]
    %v1287 = vld [vmem:[#allocation2 + $0x70] sm:$0xff]
    %v1288 = vld [vmem:[#allocation2 + $0x78] sm:$0xff]
    %v1289 = vld [vmem:[#allocation2 + $0x80] sm:$0xff]
    %v1290 = vld [vmem:[#allocation2 + $0x88] sm:$0xff]
    %v1291 = vld [vmem:[#allocation2 + $0x90] sm:$0xff]
    %v1292 = vld [vmem:[#allocation2 + $0x98] sm:$0xff]
    %v1293 = vld [vmem:[#allocation2 + $0xa0] sm:$0xff]
    %v1294 = vld [vmem:[#allocation2 + $0xa8] sm:$0xff]
    %v1295 = vld [vmem:[#allocation2 + $0xb0] sm:$0xff]
    %v1296 = vld [vmem:[#allocation2 + $0xb8] sm:$0xff]
    %v1297 = vld [vmem:[#allocation2 + $0xc0] sm:$0xff]
    %v1298 = vld [vmem:[#allocation2 + $0xc8] sm:$0xff]
    %v1299 = vld [vmem:[#allocation2 + $0xd0] sm:$0xff]
    %v1300 = vld [vmem:[#allocation2 + $0xd8] sm:$0xff]
    %v1301 = vld [vmem:[#allocation2 + $0xe0] sm:$0xff]
    %v1302 = vld [vmem:[#allocation2 + $0xe8] sm:$0xff]
    %v1303 = vld [vmem:[#allocation2 + $0xf0] sm:$0xff]
    %v1304 = vld [vmem:[#allocation2 + $0xf8] sm:$0xff]
    %v1305 = vld [vmem:[#allocation2 + $0x100] sm:$0xff]
    %v1306 = vld [vmem:[#allocation2 + $0x108] sm:$0xff]
    %v1307 = vld [vmem:[#allocation2 + $0x110] sm:$0xff]
    %v1308 = vld [vmem:[#allocation2 + $0x118] sm:$0xff]
    %v1309 = vld [vmem:[#allocation2 + $0x120] sm:$0xff]
    %v1310 = vld [vmem:[#allocation2 + $0x128] sm:$0xff]
    %v1311 = vld [vmem:[#allocation2 + $0x130] sm:$0xff]
    %v1312 = vld [vmem:[#allocation2 + $0x138] sm:$0xff]
    %v1314 = vsel %vm150, %v1274, 0
    %v1317 = vsel %vm150, %v1276, 0
    %v1320 = vsel %vm150, %v1278, 0
    %v1323 = vsel %vm150, %v1280, 0
    %v1326 = vsel %vm150, %v1282, 0
    %v1329 = vsel %vm150, %v1284, 0
    %v1332 = vsel %vm150, %v1286, 0
    %v1335 = vsel %vm150, %v1288, 0
    %v1338 = vsel %vm150, %v1290, 0
    %v1341 = vsel %vm150, %v1292, 0
    %v1344 = vsel %vm150, %v1294, 0
    %v1347 = vsel %vm150, %v1296, 0
    %v1350 = vsel %vm150, %v1298, 0
    %v1353 = vsel %vm150, %v1300, 0
    %v1356 = vsel %vm150, %v1302, 0
    %v1359 = vsel %vm150, %v1304, 0
    %v1362 = vsel %vm150, %v1306, 0
    %v1365 = vsel %vm150, %v1308, 0
    %v1368 = vsel %vm150, %v1310, 0
    %v1371 = vsel %vm150, %v1312, 0
    %1373 = vmatpush.msra.mxu0 %v1268
    %1374 = vmatpush.msra.mxu0 %v1267
    %1375 = vmatpush.msra.mxu0 %v1266
    %1376 = vmatpush.msra.mxu0 %v1265
    %1377 = vmatpush.msra.mxu0 %v1264
    %1378 = vmatpush.msra.mxu0 %v1263
    %1379 = vmatpush.msra.mxu0 %v1262
    %1380 = vmatpush.msra.mxu0 %v1261
    %1381 = vmatpush.msra.mxu0 %v1260
    %1382 = vmatpush.msra.mxu0 %v1259
    %1383 = vmatpush.msra.mxu0 %v1258
    %1384 = vmatpush.msra.mxu0 %v1257
    %1385 = vmatpush.msra.mxu0 %v1256
    %1386 = vmatpush.msra.mxu0 %v1255
    %1387 = vmatpush.msra.mxu0 %v1254
    %1388 = vmatpush.msra.mxu0 %v1253
    %1389 = vmatmul.f32.gmra.mxu0 %v1273
    %v1390 = vpop.f32.mrf.mxu0
    %v1391 = vadd.f32 0.0, %v1390
    %1392 = vmatmul.f32.gmra.mxu0 %v1275
    %v1393 = vpop.f32.mrf.mxu0
    %v1394 = vadd.f32 0.0, %v1393
    %1395 = vmatmul.f32.gmra.mxu0 %v1277
    %v1396 = vpop.f32.mrf.mxu0
    %v1397 = vadd.f32 0.0, %v1396
    %1398 = vmatmul.f32.gmra.mxu0 %v1279
    %v1399 = vpop.f32.mrf.mxu0
    %v1400 = vadd.f32 0.0, %v1399
    %1401 = vmatmul.f32.gmra.mxu0 %v1281
    %v1402 = vpop.f32.mrf.mxu0
    %v1403 = vadd.f32 0.0, %v1402
    %1404 = vmatmul.f32.gmra.mxu0 %v1283
    %v1405 = vpop.f32.mrf.mxu0
    %v1406 = vadd.f32 0.0, %v1405
    %1407 = vmatmul.f32.gmra.mxu0 %v1285
    %v1408 = vpop.f32.mrf.mxu0
    %v1409 = vadd.f32 0.0, %v1408
    %1410 = vmatmul.f32.gmra.mxu0 %v1287
    %v1411 = vpop.f32.mrf.mxu0
    %v1412 = vadd.f32 0.0, %v1411
    %1413 = vmatmul.f32.gmra.mxu0 %v1289
    %v1414 = vpop.f32.mrf.mxu0
    %v1415 = vadd.f32 0.0, %v1414
    %1416 = vmatmul.f32.gmra.mxu0 %v1291
    %v1417 = vpop.f32.mrf.mxu0
    %v1418 = vadd.f32 0.0, %v1417
    %1419 = vmatmul.f32.gmra.mxu0 %v1293
    %v1420 = vpop.f32.mrf.mxu0
    %v1421 = vadd.f32 0.0, %v1420
    %1422 = vmatmul.f32.gmra.mxu0 %v1295
    %v1423 = vpop.f32.mrf.mxu0
    %v1424 = vadd.f32 0.0, %v1423
    %1425 = vmatmul.f32.gmra.mxu0 %v1297
    %v1426 = vpop.f32.mrf.mxu0
    %v1427 = vadd.f32 0.0, %v1426
    %1428 = vmatmul.f32.gmra.mxu0 %v1299
    %v1429 = vpop.f32.mrf.mxu0
    %v1430 = vadd.f32 0.0, %v1429
    %1431 = vmatmul.f32.gmra.mxu0 %v1301
    %v1432 = vpop.f32.mrf.mxu0
    %v1433 = vadd.f32 0.0, %v1432
    %1434 = vmatmul.f32.gmra.mxu0 %v1303
    %v1435 = vpop.f32.mrf.mxu0
    %v1436 = vadd.f32 0.0, %v1435
    %1437 = vmatmul.f32.gmra.mxu0 %v1305
    %v1438 = vpop.f32.mrf.mxu0
    %v1439 = vadd.f32 0.0, %v1438
    %1440 = vmatmul.f32.gmra.mxu0 %v1307
    %v1441 = vpop.f32.mrf.mxu0
    %v1442 = vadd.f32 0.0, %v1441
    %1443 = vmatmul.f32.gmra.mxu0 %v1309
    %v1444 = vpop.f32.mrf.mxu0
    %v1445 = vadd.f32 0.0, %v1444
    %1446 = vmatmul.f32.gmra.mxu0 %v1311
    %v1447 = vpop.f32.mrf.mxu0
    %v1448 = vadd.f32 0.0, %v1447
    %1449 = vdwg.mxu0
    %1450 = vmatpush.msra.mxu0 0.0
    %1451 = vmatpush.msra.mxu0 0.0
    %1452 = vmatpush.msra.mxu0 0.0
    %1453 = vmatpush.msra.mxu0 0.0
    %1454 = vmatpush.msra.mxu0 0.0
    %1455 = vmatpush.msra.mxu0 0.0
    %1456 = vmatpush.msra.mxu0 0.0
    %1457 = vmatpush.msra.mxu0 0.0
    %1458 = vmatpush.msra.mxu0 0.0
    %1459 = vmatpush.msra.mxu0 0.0
    %1460 = vmatpush.msra.mxu0 0.0
    %1461 = vmatpush.msra.mxu0 0.0
    %1462 = vmatpush.msra.mxu0 %v1272
    %1463 = vmatpush.msra.mxu0 %v1271
    %1464 = vmatpush.msra.mxu0 %v1270
    %1465 = vmatpush.msra.mxu0 %v1269
    %1466 = vmatmul.f32.gmra.mxu0 %v1314
    %v1467 = vpop.f32.mrf.mxu0
    %v1468 = vadd.f32 %v1391, %v1467
    %1469 = vmatmul.f32.gmra.mxu0 %v1317
    %v1470 = vpop.f32.mrf.mxu0
    %v1471 = vadd.f32 %v1394, %v1470
    %1472 = vmatmul.f32.gmra.mxu0 %v1320
    %v1473 = vpop.f32.mrf.mxu0
    %v1474 = vadd.f32 %v1397, %v1473
    %1475 = vmatmul.f32.gmra.mxu0 %v1323
    %v1476 = vpop.f32.mrf.mxu0
    %v1477 = vadd.f32 %v1400, %v1476
    %1478 = vmatmul.f32.gmra.mxu0 %v1326
    %v1479 = vpop.f32.mrf.mxu0
    %v1480 = vadd.f32 %v1403, %v1479
    %1481 = vmatmul.f32.gmra.mxu0 %v1329
    %v1482 = vpop.f32.mrf.mxu0
    %v1483 = vadd.f32 %v1406, %v1482
    %1484 = vmatmul.f32.gmra.mxu0 %v1332
    %v1485 = vpop.f32.mrf.mxu0
    %v1486 = vadd.f32 %v1409, %v1485
    %1487 = vmatmul.f32.gmra.mxu0 %v1335
    %v1488 = vpop.f32.mrf.mxu0
    %v1489 = vadd.f32 %v1412, %v1488
    %1490 = vmatmul.f32.gmra.mxu0 %v1338
    %v1491 = vpop.f32.mrf.mxu0
    %v1492 = vadd.f32 %v1415, %v1491
    %1493 = vmatmul.f32.gmra.mxu0 %v1341
    %v1494 = vpop.f32.mrf.mxu0
    %v1495 = vadd.f32 %v1418, %v1494
    %1496 = vmatmul.f32.gmra.mxu0 %v1344
    %v1497 = vpop.f32.mrf.mxu0
    %v1498 = vadd.f32 %v1421, %v1497
    %1499 = vmatmul.f32.gmra.mxu0 %v1347
    %v1500 = vpop.f32.mrf.mxu0
    %v1501 = vadd.f32 %v1424, %v1500
    %1502 = vmatmul.f32.gmra.mxu0 %v1350
    %v1503 = vpop.f32.mrf.mxu0
    %v1504 = vadd.f32 %v1427, %v1503
    %1505 = vmatmul.f32.gmra.mxu0 %v1353
    %v1506 = vpop.f32.mrf.mxu0
    %v1507 = vadd.f32 %v1430, %v1506
    %1508 = vmatmul.f32.gmra.mxu0 %v1356
    %v1509 = vpop.f32.mrf.mxu0
    %v1510 = vadd.f32 %v1433, %v1509
    %1511 = vmatmul.f32.gmra.mxu0 %v1359
    %v1512 = vpop.f32.mrf.mxu0
    %v1513 = vadd.f32 %v1436, %v1512
    %1514 = vmatmul.f32.gmra.mxu0 %v1362
    %v1515 = vpop.f32.mrf.mxu0
    %v1516 = vadd.f32 %v1439, %v1515
    %1517 = vmatmul.f32.gmra.mxu0 %v1365
    %v1518 = vpop.f32.mrf.mxu0
    %v1519 = vadd.f32 %v1442, %v1518
    %1520 = vmatmul.f32.gmra.mxu0 %v1368
    %v1521 = vpop.f32.mrf.mxu0
    %v1522 = vadd.f32 %v1445, %v1521
    %1523 = vmatmul.f32.gmra.mxu0 %v1371
    %v1524 = vpop.f32.mrf.mxu0
    %v1525 = vadd.f32 %v1448, %v1524
    %1526 = vdwg.mxu0
    %v1527 = vld [vmem:[%s14] sm:$0xff]
    %v1528 = vld [vmem:[%s14 + $0x8] sm:$0xff]
    %v1529 = vld [vmem:[%s14 + $0x10] sm:$0xff]
    %v1530 = vld [vmem:[%s14 + $0x18] sm:$0xff]
    %v1531 = vld [vmem:[%s15] sm:$0xff]
    %v1532 = vld [vmem:[%s15 + $0x8] sm:$0xff]
    %v1533 = vld [vmem:[%s15 + $0x10] sm:$0xff]
    %v1534 = vld [vmem:[%s15 + $0x18] sm:$0xff]
    %v1536 = vsel %vm150, %v1468, 0
    %v1539 = vsel %vm150, %v1471, 0
    %v1542 = vsel %vm150, %v1474, 0
    %v1545 = vsel %vm150, %v1477, 0
    %v1548 = vsel %vm150, %v1480, 0
    %v1551 = vsel %vm150, %v1483, 0
    %v1554 = vsel %vm150, %v1486, 0
    %v1557 = vsel %vm150, %v1489, 0
    %v1560 = vsel %vm150, %v1492, 0
    %v1563 = vsel %vm150, %v1495, 0
    %v1566 = vsel %vm150, %v1498, 0
    %v1569 = vsel %vm150, %v1501, 0
    %v1572 = vsel %vm150, %v1504, 0
    %v1575 = vsel %vm150, %v1507, 0
    %v1578 = vsel %vm150, %v1510, 0
    %v1581 = vsel %vm150, %v1513, 0
    %v1584 = vsel %vm150, %v1516, 0
    %v1587 = vsel %vm150, %v1519, 0
    %v1590 = vsel %vm150, %v1522, 0
    %v1593 = vsel %vm150, %v1525, 0
    %1595 = vmatpush.msra.mxu0 0.0
    %1596 = vmatpush.msra.mxu0 0.0
    %1597 = vmatpush.msra.mxu0 0.0
    %1598 = vmatpush.msra.mxu0 0.0
    %1599 = vmatpush.msra.mxu0 0.0
    %1600 = vmatpush.msra.mxu0 0.0
    %1601 = vmatpush.msra.mxu0 0.0
    %1602 = vmatpush.msra.mxu0 0.0
    %1603 = vmatpush.msra.mxu0 0.0
    %1604 = vmatpush.msra.mxu0 0.0
    %1605 = vmatpush.msra.mxu0 0.0
    %1606 = vmatpush.msra.mxu0 0.0
    %1607 = vmatpush.msra.mxu0 %v1534
    %1608 = vmatpush.msra.mxu0 %v1533
    %1609 = vmatpush.msra.mxu0 %v1532
    %1610 = vmatpush.msra.mxu0 %v1531
    %1611 = vmatmul.f32.gmra.mxu0 %v1536
    %v1612 = vpop.f32.mrf.mxu0
    %v1613 = vadd.f32 0.0, %v1612
    %1614 = vmatmul.f32.gmra.mxu0 %v1539
    %v1615 = vpop.f32.mrf.mxu0
    %v1616 = vadd.f32 0.0, %v1615
    %1617 = vmatmul.f32.gmra.mxu0 %v1542
    %v1618 = vpop.f32.mrf.mxu0
    %v1619 = vadd.f32 0.0, %v1618
    %1620 = vmatmul.f32.gmra.mxu0 %v1545
    %v1621 = vpop.f32.mrf.mxu0
    %v1622 = vadd.f32 0.0, %v1621
    %1623 = vmatmul.f32.gmra.mxu0 %v1548
    %v1624 = vpop.f32.mrf.mxu0
    %v1625 = vadd.f32 0.0, %v1624
    %1626 = vmatmul.f32.gmra.mxu0 %v1551
    %v1627 = vpop.f32.mrf.mxu0
    %v1628 = vadd.f32 0.0, %v1627
    %1629 = vmatmul.f32.gmra.mxu0 %v1554
    %v1630 = vpop.f32.mrf.mxu0
    %v1631 = vadd.f32 0.0, %v1630
    %1632 = vmatmul.f32.gmra.mxu0 %v1557
    %v1633 = vpop.f32.mrf.mxu0
    %v1634 = vadd.f32 0.0, %v1633
    %1635 = vmatmul.f32.gmra.mxu0 %v1560
    %v1636 = vpop.f32.mrf.mxu0
    %v1637 = vadd.f32 0.0, %v1636
    %1638 = vmatmul.f32.gmra.mxu0 %v1563
    %v1639 = vpop.f32.mrf.mxu0
    %v1640 = vadd.f32 0.0, %v1639
    %1641 = vmatmul.f32.gmra.mxu0 %v1566
    %v1642 = vpop.f32.mrf.mxu0
    %v1643 = vadd.f32 0.0, %v1642
    %1644 = vmatmul.f32.gmra.mxu0 %v1569
    %v1645 = vpop.f32.mrf.mxu0
    %v1646 = vadd.f32 0.0, %v1645
    %1647 = vmatmul.f32.gmra.mxu0 %v1572
    %v1648 = vpop.f32.mrf.mxu0
    %v1649 = vadd.f32 0.0, %v1648
    %1650 = vmatmul.f32.gmra.mxu0 %v1575
    %v1651 = vpop.f32.mrf.mxu0
    %v1652 = vadd.f32 0.0, %v1651
    %1653 = vmatmul.f32.gmra.mxu0 %v1578
    %v1654 = vpop.f32.mrf.mxu0
    %v1655 = vadd.f32 0.0, %v1654
    %1656 = vmatmul.f32.gmra.mxu0 %v1581
    %v1657 = vpop.f32.mrf.mxu0
    %v1658 = vadd.f32 0.0, %v1657
    %1659 = vmatmul.f32.gmra.mxu0 %v1584
    %v1660 = vpop.f32.mrf.mxu0
    %v1661 = vadd.f32 0.0, %v1660
    %1662 = vmatmul.f32.gmra.mxu0 %v1587
    %v1663 = vpop.f32.mrf.mxu0
    %v1664 = vadd.f32 0.0, %v1663
    %1665 = vmatmul.f32.gmra.mxu0 %v1590
    %v1666 = vpop.f32.mrf.mxu0
    %v1667 = vadd.f32 0.0, %v1666
    %1668 = vmatmul.f32.gmra.mxu0 %v1593
    %v1669 = vpop.f32.mrf.mxu0
    %v1670 = vadd.f32 0.0, %v1669
    %1671 = vdwg.mxu0
    %v1673 = vsel %vm150, %v1253, 0
    %v1676 = vsel %vm150, %v1254, 0
    %v1679 = vsel %vm150, %v1255, 0
    %v1682 = vsel %vm150, %v1256, 0
    %v1685 = vsel %vm150, %v1257, 0
    %v1688 = vsel %vm150, %v1258, 0
    %v1691 = vsel %vm150, %v1259, 0
    %v1694 = vsel %vm150, %v1260, 0
    %v1697 = vsel %vm150, %v1261, 0
    %v1700 = vsel %vm150, %v1262, 0
    %v1703 = vsel %vm150, %v1263, 0
    %v1706 = vsel %vm150, %v1264, 0
    %v1709 = vsel %vm150, %v1265, 0
    %v1712 = vsel %vm150, %v1266, 0
    %v1715 = vsel %vm150, %v1267, 0
    %v1718 = vsel %vm150, %v1268, 0
    %v1721 = vsel %vm150, %v1269, 0
    %v1724 = vsel %vm150, %v1270, 0
    %v1727 = vsel %vm150, %v1271, 0
    %v1730 = vsel %vm150, %v1272, 0
    %1732 = vmatpush.msra.mxu0 0.0
    %1733 = vmatpush.msra.mxu0 0.0
    %1734 = vmatpush.msra.mxu0 0.0
    %1735 = vmatpush.msra.mxu0 0.0
    %1736 = vmatpush.msra.mxu0 0.0
    %1737 = vmatpush.msra.mxu0 0.0
    %1738 = vmatpush.msra.mxu0 0.0
    %1739 = vmatpush.msra.mxu0 0.0
    %1740 = vmatpush.msra.mxu0 0.0
    %1741 = vmatpush.msra.mxu0 0.0
    %1742 = vmatpush.msra.mxu0 0.0
    %1743 = vmatpush.msra.mxu0 0.0
    %1744 = vmatpush.msra.mxu0 %v1530
    %1745 = vmatpush.msra.mxu0 %v1529
    %1746 = vmatpush.msra.mxu0 %v1528
    %1747 = vmatpush.msra.mxu0 %v1527
    %1748 = vmatmul.f32.gmra.mxu0 %v1673
    %v1749 = vpop.f32.mrf.mxu0
    %v1750 = vadd.f32 %v1613, %v1749
    %1751 = vmatmul.f32.gmra.mxu0 %v1676
    %v1752 = vpop.f32.mrf.mxu0
    %v1753 = vadd.f32 %v1616, %v1752
    %1754 = vmatmul.f32.gmra.mxu0 %v1679
    %v1755 = vpop.f32.mrf.mxu0
    %v1756 = vadd.f32 %v1619, %v1755
    %1757 = vmatmul.f32.gmra.mxu0 %v1682
    %v1758 = vpop.f32.mrf.mxu0
    %v1759 = vadd.f32 %v1622, %v1758
    %1760 = vmatmul.f32.gmra.mxu0 %v1685
    %v1761 = vpop.f32.mrf.mxu0
    %v1762 = vadd.f32 %v1625, %v1761
    %1763 = vmatmul.f32.gmra.mxu0 %v1688
    %v1764 = vpop.f32.mrf.mxu0
    %v1765 = vadd.f32 %v1628, %v1764
    %1766 = vmatmul.f32.gmra.mxu0 %v1691
    %v1767 = vpop.f32.mrf.mxu0
    %v1768 = vadd.f32 %v1631, %v1767
    %1769 = vmatmul.f32.gmra.mxu0 %v1694
    %v1770 = vpop.f32.mrf.mxu0
    %v1771 = vadd.f32 %v1634, %v1770
    %1772 = vmatmul.f32.gmra.mxu0 %v1697
    %v1773 = vpop.f32.mrf.mxu0
    %v1774 = vadd.f32 %v1637, %v1773
    %1775 = vmatmul.f32.gmra.mxu0 %v1700
    %v1776 = vpop.f32.mrf.mxu0
    %v1777 = vadd.f32 %v1640, %v1776
    %1778 = vmatmul.f32.gmra.mxu0 %v1703
    %v1779 = vpop.f32.mrf.mxu0
    %v1780 = vadd.f32 %v1643, %v1779
    %1781 = vmatmul.f32.gmra.mxu0 %v1706
    %v1782 = vpop.f32.mrf.mxu0
    %v1783 = vadd.f32 %v1646, %v1782
    %1784 = vmatmul.f32.gmra.mxu0 %v1709
    %v1785 = vpop.f32.mrf.mxu0
    %v1786 = vadd.f32 %v1649, %v1785
    %1787 = vmatmul.f32.gmra.mxu0 %v1712
    %v1788 = vpop.f32.mrf.mxu0
    %v1789 = vadd.f32 %v1652, %v1788
    %1790 = vmatmul.f32.gmra.mxu0 %v1715
    %v1791 = vpop.f32.mrf.mxu0
    %v1792 = vadd.f32 %v1655, %v1791
    %1793 = vmatmul.f32.gmra.mxu0 %v1718
    %v1794 = vpop.f32.mrf.mxu0
    %v1795 = vadd.f32 %v1658, %v1794
    %1796 = vmatmul.f32.gmra.mxu0 %v1721
    %v1797 = vpop.f32.mrf.mxu0
    %v1798 = vadd.f32 %v1661, %v1797
    %1799 = vmatmul.f32.gmra.mxu0 %v1724
    %v1800 = vpop.f32.mrf.mxu0
    %v1801 = vadd.f32 %v1664, %v1800
    %1802 = vmatmul.f32.gmra.mxu0 %v1727
    %v1803 = vpop.f32.mrf.mxu0
    %v1804 = vadd.f32 %v1667, %v1803
    %1805 = vmatmul.f32.gmra.mxu0 %v1730
    %v1806 = vpop.f32.mrf.mxu0
    %v1807 = vadd.f32 %v1670, %v1806
    %1808 = vdwg.mxu0
    %v1809 = vld [vmem:[%s16] sm:$0x1]
    %v1811 = vperm.slane %v1809, 0
    %v1813 = vadd.f32 %v1750, %v1811
    %v1814 = vadd.f32 %v1753, %v1811
    %v1815 = vadd.f32 %v1756, %v1811
    %v1816 = vadd.f32 %v1759, %v1811
    %v1817 = vadd.f32 %v1762, %v1811
    %v1818 = vadd.f32 %v1765, %v1811
    %v1819 = vadd.f32 %v1768, %v1811
    %v1820 = vadd.f32 %v1771, %v1811
    %v1821 = vadd.f32 %v1774, %v1811
    %v1822 = vadd.f32 %v1777, %v1811
    %v1823 = vadd.f32 %v1780, %v1811
    %v1824 = vadd.f32 %v1783, %v1811
    %v1825 = vadd.f32 %v1786, %v1811
    %v1826 = vadd.f32 %v1789, %v1811
    %v1827 = vadd.f32 %v1792, %v1811
    %v1828 = vadd.f32 %v1795, %v1811
    %v1829 = vadd.f32 %v1798, %v1811
    %v1830 = vadd.f32 %v1801, %v1811
    %v1831 = vadd.f32 %v1804, %v1811
    %v1832 = vadd.f32 %v1807, %v1811
    %v1833 = vmax.f32 %v1813, 0.0
    %v1834 = vmax.f32 %v1814, 0.0
    %v1835 = vmax.f32 %v1815, 0.0
    %v1836 = vmax.f32 %v1816, 0.0
    %v1837 = vmax.f32 %v1817, 0.0
    %v1838 = vmax.f32 %v1818, 0.0
    %v1839 = vmax.f32 %v1819, 0.0
    %v1840 = vmax.f32 %v1820, 0.0
    %v1841 = vmax.f32 %v1821, 0.0
    %v1842 = vmax.f32 %v1822, 0.0
    %v1843 = vmax.f32 %v1823, 0.0
    %v1844 = vmax.f32 %v1824, 0.0
    %v1845 = vmax.f32 %v1825, 0.0
    %v1846 = vmax.f32 %v1826, 0.0
    %v1847 = vmax.f32 %v1827, 0.0
    %v1848 = vmax.f32 %v1828, 0.0
    %v1849 = vmax.f32 %v1829, 0.0
    %v1850 = vmax.f32 %v1830, 0.0
    %v1851 = vmax.f32 %v1831, 0.0
    %v1852 = vmax.f32 %v1832, 0.0
    %v1853 = vld [vmem:[%s17] sm:$0xff]
    %v1854 = vld [vmem:[%s17 + $0x8] sm:$0xff]
    %v1855 = vld [vmem:[%s17 + $0x10] sm:$0xff]
    %v1856 = vld [vmem:[%s17 + $0x18] sm:$0xff]
    %v1857 = vld [vmem:[%s18] sm:$0x1]
    %v1859 = vperm.slane %v1857, 0
    %v1862 = vsel %vm150, %v1833, 0
    %v1865 = vsel %vm150, %v1834, 0
    %v1868 = vsel %vm150, %v1835, 0
    %v1871 = vsel %vm150, %v1836, 0
    %v1874 = vsel %vm150, %v1837, 0
    %v1877 = vsel %vm150, %v1838, 0
    %v1880 = vsel %vm150, %v1839, 0
    %v1883 = vsel %vm150, %v1840, 0
    %v1886 = vsel %vm150, %v1841, 0
    %v1889 = vsel %vm150, %v1842, 0
    %v1892 = vsel %vm150, %v1843, 0
    %v1895 = vsel %vm150, %v1844, 0
    %v1898 = vsel %vm150, %v1845, 0
    %v1901 = vsel %vm150, %v1846, 0
    %v1904 = vsel %vm150, %v1847, 0
    %v1907 = vsel %vm150, %v1848, 0
    %v1910 = vsel %vm150, %v1849, 0
    %v1913 = vsel %vm150, %v1850, 0
    %v1916 = vsel %vm150, %v1851, 0
    %v1919 = vsel %vm150, %v1852, 0
    %1921 = vmatpush.msra.mxu0 0.0
    %1922 = vmatpush.msra.mxu0 0.0
    %1923 = vmatpush.msra.mxu0 0.0
    %1924 = vmatpush.msra.mxu0 0.0
    %1925 = vmatpush.msra.mxu0 0.0
    %1926 = vmatpush.msra.mxu0 0.0
    %1927 = vmatpush.msra.mxu0 0.0
    %1928 = vmatpush.msra.mxu0 0.0
    %1929 = vmatpush.msra.mxu0 0.0
    %1930 = vmatpush.msra.mxu0 0.0
    %1931 = vmatpush.msra.mxu0 0.0
    %1932 = vmatpush.msra.mxu0 0.0
    %1933 = vmatpush.msra.mxu0 %v1856
    %1934 = vmatpush.msra.mxu0 %v1855
    %1935 = vmatpush.msra.mxu0 %v1854
    %1936 = vmatpush.msra.mxu0 %v1853
    %1937 = vmatmul.f32.gmra.mxu0 %v1862
    %v1938 = vpop.f32.mrf.mxu0
    %v1939 = vadd.f32 %v1859, %v1938
    %1940 = vmatmul.f32.gmra.mxu0 %v1865
    %v1941 = vpop.f32.mrf.mxu0
    %v1942 = vadd.f32 %v1859, %v1941
    %1943 = vmatmul.f32.gmra.mxu0 %v1868
    %v1944 = vpop.f32.mrf.mxu0
    %v1945 = vadd.f32 %v1859, %v1944
    %1946 = vmatmul.f32.gmra.mxu0 %v1871
    %v1947 = vpop.f32.mrf.mxu0
    %v1948 = vadd.f32 %v1859, %v1947
    %1949 = vmatmul.f32.gmra.mxu0 %v1874
    %v1950 = vpop.f32.mrf.mxu0
    %v1951 = vadd.f32 %v1859, %v1950
    %1952 = vmatmul.f32.gmra.mxu0 %v1877
    %v1953 = vpop.f32.mrf.mxu0
    %v1954 = vadd.f32 %v1859, %v1953
    %1955 = vmatmul.f32.gmra.mxu0 %v1880
    %v1956 = vpop.f32.mrf.mxu0
    %v1957 = vadd.f32 %v1859, %v1956
    %1958 = vmatmul.f32.gmra.mxu0 %v1883
    %v1959 = vpop.f32.mrf.mxu0
    %v1960 = vadd.f32 %v1859, %v1959
    %1961 = vmatmul.f32.gmra.mxu0 %v1886
    %v1962 = vpop.f32.mrf.mxu0
    %v1963 = vadd.f32 %v1859, %v1962
    %1964 = vmatmul.f32.gmra.mxu0 %v1889
    %v1965 = vpop.f32.mrf.mxu0
    %v1966 = vadd.f32 %v1859, %v1965
    %1967 = vmatmul.f32.gmra.mxu0 %v1892
    %v1968 = vpop.f32.mrf.mxu0
    %v1969 = vadd.f32 %v1859, %v1968
    %1970 = vmatmul.f32.gmra.mxu0 %v1895
    %v1971 = vpop.f32.mrf.mxu0
    %v1972 = vadd.f32 %v1859, %v1971
    %1973 = vmatmul.f32.gmra.mxu0 %v1898
    %v1974 = vpop.f32.mrf.mxu0
    %v1975 = vadd.f32 %v1859, %v1974
    %1976 = vmatmul.f32.gmra.mxu0 %v1901
    %v1977 = vpop.f32.mrf.mxu0
    %v1978 = vadd.f32 %v1859, %v1977
    %1979 = vmatmul.f32.gmra.mxu0 %v1904
    %v1980 = vpop.f32.mrf.mxu0
    %v1981 = vadd.f32 %v1859, %v1980
    %1982 = vmatmul.f32.gmra.mxu0 %v1907
    %v1983 = vpop.f32.mrf.mxu0
    %v1984 = vadd.f32 %v1859, %v1983
    %1985 = vmatmul.f32.gmra.mxu0 %v1910
    %v1986 = vpop.f32.mrf.mxu0
    %v1987 = vadd.f32 %v1859, %v1986
    %1988 = vmatmul.f32.gmra.mxu0 %v1913
    %v1989 = vpop.f32.mrf.mxu0
    %v1990 = vadd.f32 %v1859, %v1989
    %1991 = vmatmul.f32.gmra.mxu0 %v1916
    %v1992 = vpop.f32.mrf.mxu0
    %v1993 = vadd.f32 %v1859, %v1992
    %1994 = vmatmul.f32.gmra.mxu0 %v1919
    %v1995 = vpop.f32.mrf.mxu0
    %v1996 = vadd.f32 %v1859, %v1995
    %1997 = vdwg.mxu0
    %v1998 = vmax.f32 %v1939, 0.0
    %v1999 = vmax.f32 %v1942, 0.0
    %v2000 = vmax.f32 %v1945, 0.0
    %v2001 = vmax.f32 %v1948, 0.0
    %v2002 = vmax.f32 %v1951, 0.0
    %v2003 = vmax.f32 %v1954, 0.0
    %v2004 = vmax.f32 %v1957, 0.0
    %v2005 = vmax.f32 %v1960, 0.0
    %v2006 = vmax.f32 %v1963, 0.0
    %v2007 = vmax.f32 %v1966, 0.0
    %v2008 = vmax.f32 %v1969, 0.0
    %v2009 = vmax.f32 %v1972, 0.0
    %v2010 = vmax.f32 %v1975, 0.0
    %v2011 = vmax.f32 %v1978, 0.0
    %v2012 = vmax.f32 %v1981, 0.0
    %v2013 = vmax.f32 %v1984, 0.0
    %v2014 = vmax.f32 %v1987, 0.0
    %v2015 = vmax.f32 %v1990, 0.0
    %v2016 = vmax.f32 %v1993, 0.0
    %v2017 = vmax.f32 %v1996, 0.0
    %v2018 = vld [vmem:[%s19] sm:$0xff]
    %v2019 = vld [vmem:[%s19 + $0x8] sm:$0xff]
    %v2020 = vld [vmem:[%s19 + $0x10] sm:$0xff]
    %v2021 = vld [vmem:[%s19 + $0x18] sm:$0xff]
    %v2022 = vld [vmem:[%s20] sm:$0x1]
    %v2024 = vperm.slane %v2022, 0
    %v2027 = vsel %vm150, %v1998, 0
    %v2030 = vsel %vm150, %v1999, 0
    %v2033 = vsel %vm150, %v2000, 0
    %v2036 = vsel %vm150, %v2001, 0
    %v2039 = vsel %vm150, %v2002, 0
    %v2042 = vsel %vm150, %v2003, 0
    %v2045 = vsel %vm150, %v2004, 0
    %v2048 = vsel %vm150, %v2005, 0
    %v2051 = vsel %vm150, %v2006, 0
    %v2054 = vsel %vm150, %v2007, 0
    %v2057 = vsel %vm150, %v2008, 0
    %v2060 = vsel %vm150, %v2009, 0
    %v2063 = vsel %vm150, %v2010, 0
    %v2066 = vsel %vm150, %v2011, 0
    %v2069 = vsel %vm150, %v2012, 0
    %v2072 = vsel %vm150, %v2013, 0
    %v2075 = vsel %vm150, %v2014, 0
    %v2078 = vsel %vm150, %v2015, 0
    %v2081 = vsel %vm150, %v2016, 0
    %v2084 = vsel %vm150, %v2017, 0
    %2086 = vmatpush.msra.mxu0 0.0
    %2087 = vmatpush.msra.mxu0 0.0
    %2088 = vmatpush.msra.mxu0 0.0
    %2089 = vmatpush.msra.mxu0 0.0
    %2090 = vmatpush.msra.mxu0 0.0
    %2091 = vmatpush.msra.mxu0 0.0
    %2092 = vmatpush.msra.mxu0 0.0
    %2093 = vmatpush.msra.mxu0 0.0
    %2094 = vmatpush.msra.mxu0 0.0
    %2095 = vmatpush.msra.mxu0 0.0
    %2096 = vmatpush.msra.mxu0 0.0
    %2097 = vmatpush.msra.mxu0 0.0
    %2098 = vmatpush.msra.mxu0 %v2021
    %2099 = vmatpush.msra.mxu0 %v2020
    %2100 = vmatpush.msra.mxu0 %v2019
    %2101 = vmatpush.msra.mxu0 %v2018
    %2102 = vmatmul.f32.gmra.mxu0 %v2027
    %v2103 = vpop.f32.mrf.mxu0
    %v2104 = vadd.f32 %v2024, %v2103
    %2105 = vmatmul.f32.gmra.mxu0 %v2030
    %v2106 = vpop.f32.mrf.mxu0
    %v2107 = vadd.f32 %v2024, %v2106
    %2108 = vmatmul.f32.gmra.mxu0 %v2033
    %v2109 = vpop.f32.mrf.mxu0
    %v2110 = vadd.f32 %v2024, %v2109
    %2111 = vmatmul.f32.gmra.mxu0 %v2036
    %v2112 = vpop.f32.mrf.mxu0
    %v2113 = vadd.f32 %v2024, %v2112
    %2114 = vmatmul.f32.gmra.mxu0 %v2039
    %v2115 = vpop.f32.mrf.mxu0
    %v2116 = vadd.f32 %v2024, %v2115
    %2117 = vmatmul.f32.gmra.mxu0 %v2042
    %v2118 = vpop.f32.mrf.mxu0
    %v2119 = vadd.f32 %v2024, %v2118
    %2120 = vmatmul.f32.gmra.mxu0 %v2045
    %v2121 = vpop.f32.mrf.mxu0
    %v2122 = vadd.f32 %v2024, %v2121
    %2123 = vmatmul.f32.gmra.mxu0 %v2048
    %v2124 = vpop.f32.mrf.mxu0
    %v2125 = vadd.f32 %v2024, %v2124
    %2126 = vmatmul.f32.gmra.mxu0 %v2051
    %v2127 = vpop.f32.mrf.mxu0
    %v2128 = vadd.f32 %v2024, %v2127
    %2129 = vmatmul.f32.gmra.mxu0 %v2054
    %v2130 = vpop.f32.mrf.mxu0
    %v2131 = vadd.f32 %v2024, %v2130
    %2132 = vmatmul.f32.gmra.mxu0 %v2057
    %v2133 = vpop.f32.mrf.mxu0
    %v2134 = vadd.f32 %v2024, %v2133
    %2135 = vmatmul.f32.gmra.mxu0 %v2060
    %v2136 = vpop.f32.mrf.mxu0
    %v2137 = vadd.f32 %v2024, %v2136
    %2138 = vmatmul.f32.gmra.mxu0 %v2063
    %v2139 = vpop.f32.mrf.mxu0
    %v2140 = vadd.f32 %v2024, %v2139
    %2141 = vmatmul.f32.gmra.mxu0 %v2066
    %v2142 = vpop.f32.mrf.mxu0
    %v2143 = vadd.f32 %v2024, %v2142
    %2144 = vmatmul.f32.gmra.mxu0 %v2069
    %v2145 = vpop.f32.mrf.mxu0
    %v2146 = vadd.f32 %v2024, %v2145
    %2147 = vmatmul.f32.gmra.mxu0 %v2072
    %v2148 = vpop.f32.mrf.mxu0
    %v2149 = vadd.f32 %v2024, %v2148
    %2150 = vmatmul.f32.gmra.mxu0 %v2075
    %v2151 = vpop.f32.mrf.mxu0
    %v2152 = vadd.f32 %v2024, %v2151
    %2153 = vmatmul.f32.gmra.mxu0 %v2078
    %v2154 = vpop.f32.mrf.mxu0
    %v2155 = vadd.f32 %v2024, %v2154
    %2156 = vmatmul.f32.gmra.mxu0 %v2081
    %v2157 = vpop.f32.mrf.mxu0
    %v2158 = vadd.f32 %v2024, %v2157
    %2159 = vmatmul.f32.gmra.mxu0 %v2084
    %v2160 = vpop.f32.mrf.mxu0
    %v2161 = vadd.f32 %v2024, %v2160
    %2162 = vdwg.mxu0
    %v2163 = vld [vmem:[%s21] sm:$0xff]
    %v2164 = vld [vmem:[%s21 + $0x8] sm:$0xff]
    %v2165 = vld [vmem:[%s21 + $0x10] sm:$0xff]
    %v2166 = vld [vmem:[%s21 + $0x18] sm:$0xff]
    %v2167 = vld [vmem:[%s22] sm:$0x1]
    %v2169 = vperm.slane %v2167, 0
    %2171 = vmatpush.msra.mxu0 0.0
    %2172 = vmatpush.msra.mxu0 0.0
    %2173 = vmatpush.msra.mxu0 0.0
    %2174 = vmatpush.msra.mxu0 0.0
    %2175 = vmatpush.msra.mxu0 0.0
    %2176 = vmatpush.msra.mxu0 0.0
    %2177 = vmatpush.msra.mxu0 0.0
    %2178 = vmatpush.msra.mxu0 0.0
    %2179 = vmatpush.msra.mxu0 0.0
    %2180 = vmatpush.msra.mxu0 0.0
    %2181 = vmatpush.msra.mxu0 0.0
    %2182 = vmatpush.msra.mxu0 0.0
    %2183 = vmatpush.msra.mxu0 %v2166
    %2184 = vmatpush.msra.mxu0 %v2165
    %2185 = vmatpush.msra.mxu0 %v2164
    %2186 = vmatpush.msra.mxu0 %v2163
    %2187 = vmatmul.f32.gmra.mxu0 %v2027
    %v2188 = vpop.f32.mrf.mxu0
    %v2189 = vadd.f32 %v2169, %v2188
    %2190 = vmatmul.f32.gmra.mxu0 %v2030
    %v2191 = vpop.f32.mrf.mxu0
    %v2192 = vadd.f32 %v2169, %v2191
    %2193 = vmatmul.f32.gmra.mxu0 %v2033
    %v2194 = vpop.f32.mrf.mxu0
    %v2195 = vadd.f32 %v2169, %v2194
    %2196 = vmatmul.f32.gmra.mxu0 %v2036
    %v2197 = vpop.f32.mrf.mxu0
    %v2198 = vadd.f32 %v2169, %v2197
    %2199 = vmatmul.f32.gmra.mxu0 %v2039
    %v2200 = vpop.f32.mrf.mxu0
    %v2201 = vadd.f32 %v2169, %v2200
    %2202 = vmatmul.f32.gmra.mxu0 %v2042
    %v2203 = vpop.f32.mrf.mxu0
    %v2204 = vadd.f32 %v2169, %v2203
    %2205 = vmatmul.f32.gmra.mxu0 %v2045
    %v2206 = vpop.f32.mrf.mxu0
    %v2207 = vadd.f32 %v2169, %v2206
    %2208 = vmatmul.f32.gmra.mxu0 %v2048
    %v2209 = vpop.f32.mrf.mxu0
    %v2210 = vadd.f32 %v2169, %v2209
    %2211 = vmatmul.f32.gmra.mxu0 %v2051
    %v2212 = vpop.f32.mrf.mxu0
    %v2213 = vadd.f32 %v2169, %v2212
    %2214 = vmatmul.f32.gmra.mxu0 %v2054
    %v2215 = vpop.f32.mrf.mxu0
    %v2216 = vadd.f32 %v2169, %v2215
    %2217 = vmatmul.f32.gmra.mxu0 %v2057
    %v2218 = vpop.f32.mrf.mxu0
    %v2219 = vadd.f32 %v2169, %v2218
    %2220 = vmatmul.f32.gmra.mxu0 %v2060
    %v2221 = vpop.f32.mrf.mxu0
    %v2222 = vadd.f32 %v2169, %v2221
    %2223 = vmatmul.f32.gmra.mxu0 %v2063
    %v2224 = vpop.f32.mrf.mxu0
    %v2225 = vadd.f32 %v2169, %v2224
    %2226 = vmatmul.f32.gmra.mxu0 %v2066
    %v2227 = vpop.f32.mrf.mxu0
    %v2228 = vadd.f32 %v2169, %v2227
    %2229 = vmatmul.f32.gmra.mxu0 %v2069
    %v2230 = vpop.f32.mrf.mxu0
    %v2231 = vadd.f32 %v2169, %v2230
    %2232 = vmatmul.f32.gmra.mxu0 %v2072
    %v2233 = vpop.f32.mrf.mxu0
    %v2234 = vadd.f32 %v2169, %v2233
    %2235 = vmatmul.f32.gmra.mxu0 %v2075
    %v2236 = vpop.f32.mrf.mxu0
    %v2237 = vadd.f32 %v2169, %v2236
    %2238 = vmatmul.f32.gmra.mxu0 %v2078
    %v2239 = vpop.f32.mrf.mxu0
    %v2240 = vadd.f32 %v2169, %v2239
    %2241 = vmatmul.f32.gmra.mxu0 %v2081
    %v2242 = vpop.f32.mrf.mxu0
    %v2243 = vadd.f32 %v2169, %v2242
    %2244 = vmatmul.f32.gmra.mxu0 %v2084
    %v2245 = vpop.f32.mrf.mxu0
    %v2246 = vadd.f32 %v2169, %v2245
    %2247 = vdwg.mxu0
    %v2248 = vld [vmem:[%s4] sm:$0xff]
    %v2249 = vld [vmem:[%s4 + $0x8] sm:$0xff]
    %v2250 = vld [vmem:[%s4 + $0x10] sm:$0xff]
    %v2251 = vld [vmem:[%s4 + $0x18] sm:$0xff]
    %v2252 = vld [vmem:[%s4 + $0x20] sm:$0xff]
    %v2253 = vld [vmem:[%s4 + $0x28] sm:$0xff]
    %v2254 = vld [vmem:[%s4 + $0x30] sm:$0xff]
    %v2255 = vld [vmem:[%s4 + $0x38] sm:$0xff]
    %v2256 = vld [vmem:[%s4 + $0x40] sm:$0xff]
    %v2257 = vld [vmem:[%s4 + $0x48] sm:$0xff]
    %v2258 = vld [vmem:[%s4 + $0x50] sm:$0xff]
    %v2259 = vld [vmem:[%s4 + $0x58] sm:$0xff]
    %v2260 = vld [vmem:[%s4 + $0x60] sm:$0xff]
    %v2261 = vld [vmem:[%s4 + $0x68] sm:$0xff]
    %v2262 = vld [vmem:[%s4 + $0x70] sm:$0xff]
    %v2263 = vld [vmem:[%s4 + $0x78] sm:$0xff]
    %v2264 = vld [vmem:[%s4 + $0x80] sm:$0xff]
    %v2265 = vld [vmem:[%s4 + $0x88] sm:$0xff]
    %v2266 = vld [vmem:[%s4 + $0x90] sm:$0xff]
    %v2267 = vld [vmem:[%s4 + $0x98] sm:$0xff]
    %v2268 = vld [vmem:[%s4 + $0xa0] sm:$0xff]
    %v2269 = vld [vmem:[%s4 + $0xa8] sm:$0xff]
    %v2270 = vld [vmem:[%s4 + $0xb0] sm:$0xff]
    %v2271 = vld [vmem:[%s4 + $0xb8] sm:$0xff]
    %v2272 = vld [vmem:[%s4 + $0xc0] sm:$0xff]
    %v2273 = vld [vmem:[%s4 + $0xc8] sm:$0xff]
    %v2274 = vld [vmem:[%s4 + $0xd0] sm:$0xff]
    %v2275 = vld [vmem:[%s4 + $0xd8] sm:$0xff]
    %v2276 = vld [vmem:[%s4 + $0xe0] sm:$0xff]
    %v2277 = vld [vmem:[%s4 + $0xe8] sm:$0xff]
    %v2279 = vsel %vm150, %v2249, 0
    %v2282 = vsel %vm150, %v2251, 0
    %v2285 = vsel %vm150, %v2253, 0
    %v2288 = vsel %vm150, %v2255, 0
    %v2291 = vsel %vm150, %v2257, 0
    %v2294 = vsel %vm150, %v2259, 0
    %v2297 = vsel %vm150, %v2261, 0
    %v2300 = vsel %vm150, %v2263, 0
    %v2303 = vsel %vm150, %v2265, 0
    %v2306 = vsel %vm150, %v2267, 0
    %v2309 = vsel %vm150, %v2269, 0
    %v2312 = vsel %vm150, %v2271, 0
    %v2315 = vsel %vm150, %v2273, 0
    %v2318 = vsel %vm150, %v2275, 0
    %v2321 = vsel %vm150, %v2277, 0
    %2323 = vmatpush.msra.mxu0 %v2149
    %2324 = vmatpush.msra.mxu0 %v2146
    %2325 = vmatpush.msra.mxu0 %v2143
    %2326 = vmatpush.msra.mxu0 %v2140
    %2327 = vmatpush.msra.mxu0 %v2137
    %2328 = vmatpush.msra.mxu0 %v2134
    %2329 = vmatpush.msra.mxu0 %v2131
    %2330 = vmatpush.msra.mxu0 %v2128
    %2331 = vmatpush.msra.mxu0 %v2125
    %2332 = vmatpush.msra.mxu0 %v2122
    %2333 = vmatpush.msra.mxu0 %v2119
    %2334 = vmatpush.msra.mxu0 %v2116
    %2335 = vmatpush.msra.mxu0 %v2113
    %2336 = vmatpush.msra.mxu0 %v2110
    %2337 = vmatpush.msra.mxu0 %v2107
    %2338 = vmatpush.msra.mxu0 %v2104
    %2339 = vmatmul.f32.gmra.mxu0 %v2248
    %v2340 = vpop.f32.mrf.mxu0
    %v2341 = vadd.f32 0.0, %v2340
    %2342 = vmatmul.f32.gmra.mxu0 %v2250
    %v2343 = vpop.f32.mrf.mxu0
    %v2344 = vadd.f32 0.0, %v2343
    %2345 = vmatmul.f32.gmra.mxu0 %v2252
    %v2346 = vpop.f32.mrf.mxu0
    %v2347 = vadd.f32 0.0, %v2346
    %2348 = vmatmul.f32.gmra.mxu0 %v2254
    %v2349 = vpop.f32.mrf.mxu0
    %v2350 = vadd.f32 0.0, %v2349
    %2351 = vmatmul.f32.gmra.mxu0 %v2256
    %v2352 = vpop.f32.mrf.mxu0
    %v2353 = vadd.f32 0.0, %v2352
    %2354 = vmatmul.f32.gmra.mxu0 %v2258
    %v2355 = vpop.f32.mrf.mxu0
    %v2356 = vadd.f32 0.0, %v2355
    %2357 = vmatmul.f32.gmra.mxu0 %v2260
    %v2358 = vpop.f32.mrf.mxu0
    %v2359 = vadd.f32 0.0, %v2358
    %2360 = vmatmul.f32.gmra.mxu0 %v2262
    %v2361 = vpop.f32.mrf.mxu0
    %v2362 = vadd.f32 0.0, %v2361
    %2363 = vmatmul.f32.gmra.mxu0 %v2264
    %v2364 = vpop.f32.mrf.mxu0
    %v2365 = vadd.f32 0.0, %v2364
    %2366 = vmatmul.f32.gmra.mxu0 %v2266
    %v2367 = vpop.f32.mrf.mxu0
    %v2368 = vadd.f32 0.0, %v2367
    %2369 = vmatmul.f32.gmra.mxu0 %v2268
    %v2370 = vpop.f32.mrf.mxu0
    %v2371 = vadd.f32 0.0, %v2370
    %2372 = vmatmul.f32.gmra.mxu0 %v2270
    %v2373 = vpop.f32.mrf.mxu0
    %v2374 = vadd.f32 0.0, %v2373
    %2375 = vmatmul.f32.gmra.mxu0 %v2272
    %v2376 = vpop.f32.mrf.mxu0
    %v2377 = vadd.f32 0.0, %v2376
    %2378 = vmatmul.f32.gmra.mxu0 %v2274
    %v2379 = vpop.f32.mrf.mxu0
    %v2380 = vadd.f32 0.0, %v2379
    %2381 = vmatmul.f32.gmra.mxu0 %v2276
    %v2382 = vpop.f32.mrf.mxu0
    %v2383 = vadd.f32 0.0, %v2382
    %2384 = vdwg.mxu0
    %2385 = vmatpush.msra.mxu0 0.0
    %2386 = vmatpush.msra.mxu0 0.0
    %2387 = vmatpush.msra.mxu0 0.0
    %2388 = vmatpush.msra.mxu0 0.0
    %2389 = vmatpush.msra.mxu0 0.0
    %2390 = vmatpush.msra.mxu0 0.0
    %2391 = vmatpush.msra.mxu0 0.0
    %2392 = vmatpush.msra.mxu0 0.0
    %2393 = vmatpush.msra.mxu0 0.0
    %2394 = vmatpush.msra.mxu0 0.0
    %2395 = vmatpush.msra.mxu0 0.0
    %2396 = vmatpush.msra.mxu0 0.0
    %2397 = vmatpush.msra.mxu0 %v2161
    %2398 = vmatpush.msra.mxu0 %v2158
    %2399 = vmatpush.msra.mxu0 %v2155
    %2400 = vmatpush.msra.mxu0 %v2152
    %2401 = vmatmul.f32.gmra.mxu0 %v2279
    %v2402 = vpop.f32.mrf.mxu0
    %v2403 = vadd.f32 %v2341, %v2402
    %2404 = vmatmul.f32.gmra.mxu0 %v2282
    %v2405 = vpop.f32.mrf.mxu0
    %v2406 = vadd.f32 %v2344, %v2405
    %2407 = vmatmul.f32.gmra.mxu0 %v2285
    %v2408 = vpop.f32.mrf.mxu0
    %v2409 = vadd.f32 %v2347, %v2408
    %2410 = vmatmul.f32.gmra.mxu0 %v2288
    %v2411 = vpop.f32.mrf.mxu0
    %v2412 = vadd.f32 %v2350, %v2411
    %2413 = vmatmul.f32.gmra.mxu0 %v2291
    %v2414 = vpop.f32.mrf.mxu0
    %v2415 = vadd.f32 %v2353, %v2414
    %2416 = vmatmul.f32.gmra.mxu0 %v2294
    %v2417 = vpop.f32.mrf.mxu0
    %v2418 = vadd.f32 %v2356, %v2417
    %2419 = vmatmul.f32.gmra.mxu0 %v2297
    %v2420 = vpop.f32.mrf.mxu0
    %v2421 = vadd.f32 %v2359, %v2420
    %2422 = vmatmul.f32.gmra.mxu0 %v2300
    %v2423 = vpop.f32.mrf.mxu0
    %v2424 = vadd.f32 %v2362, %v2423
    %2425 = vmatmul.f32.gmra.mxu0 %v2303
    %v2426 = vpop.f32.mrf.mxu0
    %v2427 = vadd.f32 %v2365, %v2426
    %2428 = vmatmul.f32.gmra.mxu0 %v2306
    %v2429 = vpop.f32.mrf.mxu0
    %v2430 = vadd.f32 %v2368, %v2429
    %2431 = vmatmul.f32.gmra.mxu0 %v2309
    %v2432 = vpop.f32.mrf.mxu0
    %v2433 = vadd.f32 %v2371, %v2432
    %2434 = vmatmul.f32.gmra.mxu0 %v2312
    %v2435 = vpop.f32.mrf.mxu0
    %v2436 = vadd.f32 %v2374, %v2435
    %2437 = vmatmul.f32.gmra.mxu0 %v2315
    %v2438 = vpop.f32.mrf.mxu0
    %v2439 = vadd.f32 %v2377, %v2438
    %2440 = vmatmul.f32.gmra.mxu0 %v2318
    %v2441 = vpop.f32.mrf.mxu0
    %v2442 = vadd.f32 %v2380, %v2441
    %2443 = vmatmul.f32.gmra.mxu0 %v2321
    %v2444 = vpop.f32.mrf.mxu0
    %v2445 = vadd.f32 %v2383, %v2444
    %2446 = vdwg.mxu0
    %v2447 = vld [vmem:[%s5] sm:$0xff]
    %v2448 = vld [vmem:[%s5 + $0x8] sm:$0xff]
    %v2449 = vld [vmem:[%s5 + $0x10] sm:$0xff]
    %v2450 = vld [vmem:[%s5 + $0x18] sm:$0xff]
    %v2451 = vld [vmem:[%s5 + $0x20] sm:$0xff]
    %v2452 = vld [vmem:[%s5 + $0x28] sm:$0xff]
    %v2453 = vld [vmem:[%s5 + $0x30] sm:$0xff]
    %v2454 = vld [vmem:[%s5 + $0x38] sm:$0xff]
    %v2455 = vld [vmem:[%s5 + $0x40] sm:$0xff]
    %v2456 = vld [vmem:[%s5 + $0x48] sm:$0xff]
    %v2457 = vld [vmem:[%s5 + $0x50] sm:$0xff]
    %v2458 = vld [vmem:[%s5 + $0x58] sm:$0xff]
    %v2459 = vld [vmem:[%s5 + $0x60] sm:$0xff]
    %v2460 = vld [vmem:[%s5 + $0x68] sm:$0xff]
    %v2461 = vld [vmem:[%s5 + $0x70] sm:$0xff]
    %v2462 = vld [vmem:[%s5 + $0x78] sm:$0xff]
    %v2463 = vld [vmem:[%s5 + $0x80] sm:$0xff]
    %v2464 = vld [vmem:[%s5 + $0x88] sm:$0xff]
    %v2465 = vld [vmem:[%s5 + $0x90] sm:$0xff]
    %v2466 = vld [vmem:[%s5 + $0x98] sm:$0xff]
    %v2467 = vld [vmem:[%s5 + $0xa0] sm:$0xff]
    %v2468 = vld [vmem:[%s5 + $0xa8] sm:$0xff]
    %v2469 = vld [vmem:[%s5 + $0xb0] sm:$0xff]
    %v2470 = vld [vmem:[%s5 + $0xb8] sm:$0xff]
    %v2471 = vld [vmem:[%s5 + $0xc0] sm:$0xff]
    %v2472 = vld [vmem:[%s5 + $0xc8] sm:$0xff]
    %v2473 = vld [vmem:[%s5 + $0xd0] sm:$0xff]
    %v2474 = vld [vmem:[%s5 + $0xd8] sm:$0xff]
    %v2475 = vld [vmem:[%s5 + $0xe0] sm:$0xff]
    %v2476 = vld [vmem:[%s5 + $0xe8] sm:$0xff]
    %v2478 = vsel %vm150, %v2448, 0
    %v2481 = vsel %vm150, %v2450, 0
    %v2484 = vsel %vm150, %v2452, 0
    %v2487 = vsel %vm150, %v2454, 0
    %v2490 = vsel %vm150, %v2456, 0
    %v2493 = vsel %vm150, %v2458, 0
    %v2496 = vsel %vm150, %v2460, 0
    %v2499 = vsel %vm150, %v2462, 0
    %v2502 = vsel %vm150, %v2464, 0
    %v2505 = vsel %vm150, %v2466, 0
    %v2508 = vsel %vm150, %v2468, 0
    %v2511 = vsel %vm150, %v2470, 0
    %v2514 = vsel %vm150, %v2472, 0
    %v2517 = vsel %vm150, %v2474, 0
    %v2520 = vsel %vm150, %v2476, 0
    %2522 = vmatpush.msra.mxu0 %v2234
    %2523 = vmatpush.msra.mxu0 %v2231
    %2524 = vmatpush.msra.mxu0 %v2228
    %2525 = vmatpush.msra.mxu0 %v2225
    %2526 = vmatpush.msra.mxu0 %v2222
    %2527 = vmatpush.msra.mxu0 %v2219
    %2528 = vmatpush.msra.mxu0 %v2216
    %2529 = vmatpush.msra.mxu0 %v2213
    %2530 = vmatpush.msra.mxu0 %v2210
    %2531 = vmatpush.msra.mxu0 %v2207
    %2532 = vmatpush.msra.mxu0 %v2204
    %2533 = vmatpush.msra.mxu0 %v2201
    %2534 = vmatpush.msra.mxu0 %v2198
    %2535 = vmatpush.msra.mxu0 %v2195
    %2536 = vmatpush.msra.mxu0 %v2192
    %2537 = vmatpush.msra.mxu0 %v2189
    %2538 = vmatmul.f32.gmra.mxu0 %v2447
    %v2539 = vpop.f32.mrf.mxu0
    %v2540 = vadd.f32 0.0, %v2539
    %2541 = vmatmul.f32.gmra.mxu0 %v2449
    %v2542 = vpop.f32.mrf.mxu0
    %v2543 = vadd.f32 0.0, %v2542
    %2544 = vmatmul.f32.gmra.mxu0 %v2451
    %v2545 = vpop.f32.mrf.mxu0
    %v2546 = vadd.f32 0.0, %v2545
    %2547 = vmatmul.f32.gmra.mxu0 %v2453
    %v2548 = vpop.f32.mrf.mxu0
    %v2549 = vadd.f32 0.0, %v2548
    %2550 = vmatmul.f32.gmra.mxu0 %v2455
    %v2551 = vpop.f32.mrf.mxu0
    %v2552 = vadd.f32 0.0, %v2551
    %2553 = vmatmul.f32.gmra.mxu0 %v2457
    %v2554 = vpop.f32.mrf.mxu0
    %v2555 = vadd.f32 0.0, %v2554
    %2556 = vmatmul.f32.gmra.mxu0 %v2459
    %v2557 = vpop.f32.mrf.mxu0
    %v2558 = vadd.f32 0.0, %v2557
    %2559 = vmatmul.f32.gmra.mxu0 %v2461
    %v2560 = vpop.f32.mrf.mxu0
    %v2561 = vadd.f32 0.0, %v2560
    %2562 = vmatmul.f32.gmra.mxu0 %v2463
    %v2563 = vpop.f32.mrf.mxu0
    %v2564 = vadd.f32 0.0, %v2563
    %2565 = vmatmul.f32.gmra.mxu0 %v2465
    %v2566 = vpop.f32.mrf.mxu0
    %v2567 = vadd.f32 0.0, %v2566
    %2568 = vmatmul.f32.gmra.mxu0 %v2467
    %v2569 = vpop.f32.mrf.mxu0
    %v2570 = vadd.f32 0.0, %v2569
    %2571 = vmatmul.f32.gmra.mxu0 %v2469
    %v2572 = vpop.f32.mrf.mxu0
    %v2573 = vadd.f32 0.0, %v2572
    %2574 = vmatmul.f32.gmra.mxu0 %v2471
    %v2575 = vpop.f32.mrf.mxu0
    %v2576 = vadd.f32 0.0, %v2575
    %2577 = vmatmul.f32.gmra.mxu0 %v2473
    %v2578 = vpop.f32.mrf.mxu0
    %v2579 = vadd.f32 0.0, %v2578
    %2580 = vmatmul.f32.gmra.mxu0 %v2475
    %v2581 = vpop.f32.mrf.mxu0
    %v2582 = vadd.f32 0.0, %v2581
    %2583 = vdwg.mxu0
    %2584 = vmatpush.msra.mxu0 0.0
    %2585 = vmatpush.msra.mxu0 0.0
    %2586 = vmatpush.msra.mxu0 0.0
    %2587 = vmatpush.msra.mxu0 0.0
    %2588 = vmatpush.msra.mxu0 0.0
    %2589 = vmatpush.msra.mxu0 0.0
    %2590 = vmatpush.msra.mxu0 0.0
    %2591 = vmatpush.msra.mxu0 0.0
    %2592 = vmatpush.msra.mxu0 0.0
    %2593 = vmatpush.msra.mxu0 0.0
    %2594 = vmatpush.msra.mxu0 0.0
    %2595 = vmatpush.msra.mxu0 0.0
    %2596 = vmatpush.msra.mxu0 %v2246
    %2597 = vmatpush.msra.mxu0 %v2243
    %2598 = vmatpush.msra.mxu0 %v2240
    %2599 = vmatpush.msra.mxu0 %v2237
    %2600 = vmatmul.f32.gmra.mxu0 %v2478
    %v2601 = vpop.f32.mrf.mxu0
    %v2602 = vadd.f32 %v2540, %v2601
    %2603 = vmatmul.f32.gmra.mxu0 %v2481
    %v2604 = vpop.f32.mrf.mxu0
    %v2605 = vadd.f32 %v2543, %v2604
    %2606 = vmatmul.f32.gmra.mxu0 %v2484
    %v2607 = vpop.f32.mrf.mxu0
    %v2608 = vadd.f32 %v2546, %v2607
    %2609 = vmatmul.f32.gmra.mxu0 %v2487
    %v2610 = vpop.f32.mrf.mxu0
    %v2611 = vadd.f32 %v2549, %v2610
    %2612 = vmatmul.f32.gmra.mxu0 %v2490
    %v2613 = vpop.f32.mrf.mxu0
    %v2614 = vadd.f32 %v2552, %v2613
    %2615 = vmatmul.f32.gmra.mxu0 %v2493
    %v2616 = vpop.f32.mrf.mxu0
    %v2617 = vadd.f32 %v2555, %v2616
    %2618 = vmatmul.f32.gmra.mxu0 %v2496
    %v2619 = vpop.f32.mrf.mxu0
    %v2620 = vadd.f32 %v2558, %v2619
    %2621 = vmatmul.f32.gmra.mxu0 %v2499
    %v2622 = vpop.f32.mrf.mxu0
    %v2623 = vadd.f32 %v2561, %v2622
    %2624 = vmatmul.f32.gmra.mxu0 %v2502
    %v2625 = vpop.f32.mrf.mxu0
    %v2626 = vadd.f32 %v2564, %v2625
    %2627 = vmatmul.f32.gmra.mxu0 %v2505
    %v2628 = vpop.f32.mrf.mxu0
    %v2629 = vadd.f32 %v2567, %v2628
    %2630 = vmatmul.f32.gmra.mxu0 %v2508
    %v2631 = vpop.f32.mrf.mxu0
    %v2632 = vadd.f32 %v2570, %v2631
    %2633 = vmatmul.f32.gmra.mxu0 %v2511
    %v2634 = vpop.f32.mrf.mxu0
    %v2635 = vadd.f32 %v2573, %v2634
    %2636 = vmatmul.f32.gmra.mxu0 %v2514
    %v2637 = vpop.f32.mrf.mxu0
    %v2638 = vadd.f32 %v2576, %v2637
    %2639 = vmatmul.f32.gmra.mxu0 %v2517
    %v2640 = vpop.f32.mrf.mxu0
    %v2641 = vadd.f32 %v2579, %v2640
    %2642 = vmatmul.f32.gmra.mxu0 %v2520
    %v2643 = vpop.f32.mrf.mxu0
    %v2644 = vadd.f32 %v2582, %v2643
    %2645 = vdwg.mxu0
    %v2646 = vmul.f32 %v2403, %v2602
    %v2647 = vmul.f32 %v2406, %v2605
    %v2648 = vmul.f32 %v2409, %v2608
    %v2649 = vmul.f32 %v2412, %v2611
    %v2650 = vmul.f32 %v2415, %v2614
    %v2651 = vmul.f32 %v2418, %v2617
    %v2652 = vmul.f32 %v2421, %v2620
    %v2653 = vmul.f32 %v2424, %v2623
    %v2654 = vmul.f32 %v2427, %v2626
    %v2655 = vmul.f32 %v2430, %v2629
    %v2656 = vmul.f32 %v2433, %v2632
    %v2657 = vmul.f32 %v2436, %v2635
    %v2658 = vmul.f32 %v2439, %v2638
    %v2659 = vmul.f32 %v2442, %v2641
    %v2660 = vmul.f32 %v2445, %v2644
    %v2661 = vsel %vm367, %v2646, 0.0
    %2662 = vadd.xlane.f32.xlu0 %v2661
    %v2663 = vpop.xlane.xlu0 %2662
    %v2664 = vsel %vm367, %v2647, 0.0
    %2665 = vadd.xlane.f32.xlu0 %v2664
    %v2666 = vpop.xlane.xlu0 %2665
    %v2667 = vsel %vm367, %v2648, 0.0
    %2668 = vadd.xlane.f32.xlu0 %v2667
    %v2669 = vpop.xlane.xlu0 %2668
    %v2670 = vsel %vm367, %v2649, 0.0
    %2671 = vadd.xlane.f32.xlu0 %v2670
    %v2672 = vpop.xlane.xlu0 %2671
    %v2673 = vsel %vm367, %v2650, 0.0
    %2674 = vadd.xlane.f32.xlu0 %v2673
    %v2675 = vpop.xlane.xlu0 %2674
    %v2676 = vsel %vm367, %v2651, 0.0
    %2677 = vadd.xlane.f32.xlu0 %v2676
    %v2678 = vpop.xlane.xlu0 %2677
    %v2679 = vsel %vm367, %v2652, 0.0
    %2680 = vadd.xlane.f32.xlu0 %v2679
    %v2681 = vpop.xlane.xlu0 %2680
    %v2682 = vsel %vm367, %v2653, 0.0
    %2683 = vadd.xlane.f32.xlu0 %v2682
    %v2684 = vpop.xlane.xlu0 %2683
    %v2685 = vsel %vm367, %v2654, 0.0
    %2686 = vadd.xlane.f32.xlu0 %v2685
    %v2687 = vpop.xlane.xlu0 %2686
    %v2688 = vsel %vm367, %v2655, 0.0
    %2689 = vadd.xlane.f32.xlu0 %v2688
    %v2690 = vpop.xlane.xlu0 %2689
    %v2691 = vsel %vm367, %v2656, 0.0
    %2692 = vadd.xlane.f32.xlu0 %v2691
    %v2693 = vpop.xlane.xlu0 %2692
    %v2694 = vsel %vm367, %v2657, 0.0
    %2695 = vadd.xlane.f32.xlu0 %v2694
    %v2696 = vpop.xlane.xlu0 %2695
    %v2697 = vsel %vm367, %v2658, 0.0
    %2698 = vadd.xlane.f32.xlu0 %v2697
    %v2699 = vpop.xlane.xlu0 %2698
    %v2700 = vsel %vm367, %v2659, 0.0
    %2701 = vadd.xlane.f32.xlu0 %v2700
    %v2702 = vpop.xlane.xlu0 %2701
    %v2703 = vsel %vm367, %v2660, 0.0
    %2704 = vadd.xlane.f32.xlu0 %v2703
    %v2705 = vpop.xlane.xlu0 %2704
    %v2706 = vld [vmem:[%s6] sm:$0xff]
    %v2707 = vld [vmem:[%s6 + $0x8] sm:$0xff]
    %v2708 = vld [vmem:[%s6 + $0x10] sm:$0xff]
    %v2709 = vld [vmem:[%s6 + $0x18] sm:$0xff]
    %v2710 = vld [vmem:[%s6 + $0x20] sm:$0xff]
    %v2711 = vld [vmem:[%s6 + $0x28] sm:$0xff]
    %v2712 = vld [vmem:[%s6 + $0x30] sm:$0xff]
    %v2713 = vld [vmem:[%s6 + $0x38] sm:$0xff]
    %v2714 = vld [vmem:[%s6 + $0x40] sm:$0xff]
    %v2715 = vld [vmem:[%s6 + $0x48] sm:$0xff]
    %v2716 = vld [vmem:[%s6 + $0x50] sm:$0xff]
    %v2717 = vld [vmem:[%s6 + $0x58] sm:$0xff]
    %v2718 = vld [vmem:[%s6 + $0x60] sm:$0xff]
    %v2719 = vld [vmem:[%s6 + $0x68] sm:$0xff]
    %v2720 = vld [vmem:[%s6 + $0x70] sm:$0xff]
    %v2721 = vmul.f32 %v2663, %v2706
    %v2722 = vmul.f32 %v2666, %v2707
    %v2723 = vmul.f32 %v2669, %v2708
    %v2724 = vmul.f32 %v2672, %v2709
    %v2725 = vmul.f32 %v2675, %v2710
    %v2726 = vmul.f32 %v2678, %v2711
    %v2727 = vmul.f32 %v2681, %v2712
    %v2728 = vmul.f32 %v2684, %v2713
    %v2729 = vmul.f32 %v2687, %v2714
    %v2730 = vmul.f32 %v2690, %v2715
    %v2731 = vmul.f32 %v2693, %v2716
    %v2732 = vmul.f32 %v2696, %v2717
    %v2733 = vmul.f32 %v2699, %v2718
    %v2734 = vmul.f32 %v2702, %v2719
    %v2735 = vmul.f32 %v2705, %v2720
    %v2736 = vld [vmem:[%s7] sm:$0xff]
    %v2737 = vld [vmem:[%s7 + $0x8] sm:$0x3]
    %vm2738 = vcmask 982016
    %v2740 = vsel %vm2738, %v2736, 0
    %v2743 = vsel %vm2738, %v2737, 0
    %2745 = vmatpush.msra.mxu0 0.0
    %2746 = vmatpush.msra.mxu0 %v2735
    %2747 = vmatpush.msra.mxu0 %v2734
    %2748 = vmatpush.msra.mxu0 %v2733
    %2749 = vmatpush.msra.mxu0 %v2732
    %2750 = vmatpush.msra.mxu0 %v2731
    %2751 = vmatpush.msra.mxu0 %v2730
    %2752 = vmatpush.msra.mxu0 %v2729
    %2753 = vmatpush.msra.mxu0 %v2728
    %2754 = vmatpush.msra.mxu0 %v2727
    %2755 = vmatpush.msra.mxu0 %v2726
    %2756 = vmatpush.msra.mxu0 %v2725
    %2757 = vmatpush.msra.mxu0 %v2724
    %2758 = vmatpush.msra.mxu0 %v2723
    %2759 = vmatpush.msra.mxu0 %v2722
    %2760 = vmatpush.msra.mxu0 %v2721
    %2761 = vmatmul.f32.gmra.mxu0 %v2740
    %v2762 = vpop.f32.mrf.mxu0
    %v2763 = vadd.f32 0.0, %v2762
    %2764 = vmatmul.f32.gmra.mxu0 %v2743
    %v2765 = vpop.f32.mrf.mxu0
    %v2766 = vadd.f32 0.0, %v2765
    %2767 = vdwg.mxu0
    %vm2768 = vcmask 48128
    %v2769 = vsel %vm2768, %v2763, -inf
    %2770 = vmax.xlane.f32.xlu0 %v2769
    %v2771 = vpop.xlane.xlu0 %2770
    %vm2772 = vcmask 41984
    %v2773 = vsel %vm2772, %v2766, -inf
    %2774 = vmax.xlane.f32.xlu0 %v2773
    %v2775 = vpop.xlane.xlu0 %2774
    %v2776 = vsub.f32 %v2763, %v2771
    %v2777 = vsub.f32 %v2766, %v2775
    %v2778 = vmul.f32 %v2776, 1.442695
    %v2779 = vpow.pop %v2778
    %v2780 = vmul.f32 %v2777, 1.442695
    %v2781 = vpow.pop %v2780
    %v2782 = vsel %vm2768, %v2779, 0.0
    %2783 = vadd.xlane.f32.xlu0 %v2782
    %v2784 = vpop.xlane.xlu0 %2783
    %v2785 = vsel %vm2772, %v2781, 0.0
    %2786 = vadd.xlane.f32.xlu0 %v2785
    %v2787 = vpop.xlane.xlu0 %2786
    %v2788 = vrcp.pop %v2784
    %v2789 = vmul.f32 %v2784, %v2788
    %v2790 = vsub.f32 1.0, %v2789
    %v2791 = vmul.f32 %v2788, %v2790
    %v2792 = vadd.f32 %v2788, %v2791
    %vm2793 = vweird.f32 %v2784
    %vm2794 = vweird.f32 %v2788
    %vm2795 = vmor %vm2793, %vm2794
    %v2796 = vsel %vm2795, %v2788, %v2792
    %v2797 = vand.u32 2147483647, %v2784
    %vm2798 = vcmp.eq.f32.partialorder %v2797, 8.507059e+37
    %v2799 = vand.u32 %v2784, 2147483648
    %v2800 = vor.u32 1.1754944e-38, %v2799
    %v2801 = vsel %vm2798, %v2800, %v2796
    %v2802 = vmul.f32 %v2779, %v2801
    %v2803 = vrcp.pop %v2787
    %v2804 = vmul.f32 %v2787, %v2803
    %v2805 = vsub.f32 1.0, %v2804
    %v2806 = vmul.f32 %v2803, %v2805
    %v2807 = vadd.f32 %v2803, %v2806
    %vm2808 = vweird.f32 %v2787
    %vm2809 = vweird.f32 %v2803
    %vm2810 = vmor %vm2808, %vm2809
    %v2811 = vsel %vm2810, %v2803, %v2807
    %v2812 = vand.u32 2147483647, %v2787
    %vm2813 = vcmp.eq.f32.partialorder %v2812, 8.507059e+37
    %v2814 = vand.u32 %v2787, 2147483648
    %v2815 = vor.u32 1.1754944e-38, %v2814
    %v2816 = vsel %vm2813, %v2815, %v2811
    %v2817 = vmul.f32 %v2781, %v2816
    %2818 = vst.msk [vmem:[%s23] sm:$0xff] %vm2768, %v2802
    %2819 = vst.msk [vmem:[%s23 + $0x8] sm:$0x3] %vm2772, %v2817
    // Predicated region
    $region98: #{tpu_custom_call.1} parent=1 // pred_check
      _
    $region99: #{tpu_custom_call.1} parent=1 // pred_check_branch
      %2821 = sbr.rel (0) target = $region101
    $region100: #{tpu_custom_call.1} parent=1 // pred_region
      _
    $region101: #{tpu_custom_call.1} parent=1 // pred_fallthru
      _
    // Predicated region
    $region102: #{tpu_custom_call.1} parent=1 // pred_check
      _
    $region103: #{tpu_custom_call.1} parent=1 // pred_check_branch
      %2823 = sbr.rel (0) target = $region105
    $region104: #{tpu_custom_call.1} parent=1 // pred_region
      _
    $region105: #{tpu_custom_call.1} parent=1 // pred_fallthru
      _
    %2824 = vsyncpa [#allocation3], 1

</llo_original>
